<compile_context>
chip_gen: v7x
topology: tpu7x:2x2x1
jax: 0.10.0
libtpu: 0.0.40
codegen_flags: <defaults>
</compile_context>

<pallas_src>
import functools

import jax
import jax.numpy as jnp
import numpy as np
from jax.experimental import pallas as pl
from jax.experimental.pallas import tpu as pltpu


# ----------------------------- generation-aware config -----------------------------

@functools.lru_cache(maxsize=None)
def _vmem_capacity_bytes():
    try:
        return int(pltpu.get_tpu_info().vmem_capacity_bytes)
    except Exception:
        return 64 * 1024 * 1024          # conservative (v7x-sized) fallback


def _vmem_limit_bytes():
    cap = _vmem_capacity_bytes()
    # v5e/v6e: 128 MiB per core -> raise the scoped limit; v7x: 64 MiB -> stay <= 48 MiB.
    return (96 if cap >= 100 * 1024 * 1024 else 48) * 1024 * 1024


def _linear_tile_candidates():
    cap = _vmem_capacity_bytes()
    return (1024, 512, 256, 128) if cap >= 100 * 1024 * 1024 else (512, 256, 128)


def _mxu(a):
    """bf16 MXU operands, f32 accumulation (native MXU path on v5e/v6e/v7x)."""
    return a.astype(jnp.bfloat16) if a.dtype == jnp.float32 else a


# ----------------------------- tiled linear (x @ W + b) -----------------------------

def _linear_kernel(x_ref, w_ref, b_ref, o_ref, acc_ref):
    @pl.when(pl.program_id(2) == 0)
    def _():
        acc_ref[...] = jnp.zeros_like(acc_ref)

    acc_ref[...] += jnp.dot(_mxu(x_ref[...]), _mxu(w_ref[...]),
                            preferred_element_type=jnp.float32)

    @pl.when(pl.program_id(2) == pl.num_programs(2) - 1)
    def _():
        o_ref[...] = (acc_ref[...] + b_ref[...].astype(jnp.float32)).astype(o_ref.dtype)


def _pick_tile(n, candidates):
    for c in candidates:
        if n % c == 0:
            return c
    return n   # fall back to the full dimension (always legal)


def pallas_linear(x, w, b):
    """x: (N, K), w: (K, M), b: (1, M) -> x @ w + b, tiled and pipelined."""
    N, K = x.shape
    M = w.shape[1]
    cands = _linear_tile_candidates()
    tm, tn = _pick_tile(N, cands), _pick_tile(M, cands)
    tk = _pick_tile(K, (512, 256, 128))
    return pl.pallas_call(
        _linear_kernel,
        out_shape=jax.ShapeDtypeStruct((N, M), x.dtype),
        grid_spec=pltpu.PrefetchScalarGridSpec(
            num_scalar_prefetch=0,
            grid=(N // tm, M // tn, K // tk),
            in_specs=[
                pl.BlockSpec((tm, tk), lambda i, j, k: (i, k)),
                pl.BlockSpec((tk, tn), lambda i, j, k: (k, j)),
                pl.BlockSpec((1, tn), lambda i, j, k: (0, j)),
            ],
            out_specs=pl.BlockSpec((tm, tn), lambda i, j, k: (i, j)),
            scratch_shapes=[pltpu.VMEM((tm, tn), jnp.float32)],
        ),
        compiler_params=pltpu.CompilerParams(
            dimension_semantics=("parallel", "parallel", "arbitrary"),
            vmem_limit_bytes=_vmem_limit_bytes()),
    )(x, w, b)


# ----------------------------- flash (kv-tiled) multi-head attention -----------------------------

def _flash_mha_kernel(q_ref, k_ref, v_ref, o_ref, m_sc, l_sc, acc_sc, *, hpb, hd):
    ki = pl.program_id(3)

    @pl.when(ki == 0)
    def _():
        m_sc[...] = jnp.full_like(m_sc, -jnp.inf)
        l_sc[...] = jnp.zeros_like(l_sc)
        acc_sc[...] = jnp.zeros_like(acc_sc)

    # hpb is 1-2 for SAM shapes; with kv tiling only a (tq, tkv) scores tile per
    # head is ever live, so this short static unroll stays within vreg/VMEM budget.
    for n in range(hpb):
        q = _mxu(q_ref[0, n])                       # (tq,  Daug)  [q | rel_h | rel_w | 0]
        k = _mxu(k_ref[0, n])                       # (tkv, Daug)  [k*scale | 1_h | 1_w | 0]
        # Single fused MXU pass: scale*q.k^T + rel_h[s, t//W] + rel_w[s, t%W]
        s = jax.lax.dot_general(q, k, (((1,), (1,)), ((), ())),
                                preferred_element_type=jnp.float32)   # (tq, tkv)
        m_prev = m_sc[n]                            # (tq, 1)
        m_new = jnp.maximum(m_prev, jnp.max(s, axis=-1, keepdims=True))
        alpha = jnp.exp(m_prev - m_new)
        p = jnp.exp(s - m_new)
        l_sc[n] = alpha * l_sc[n] + jnp.sum(p, axis=-1, keepdims=True)
        v = v_ref[0, :, n * hd:(n + 1) * hd]        # (tkv, hd), streamed from fused qkv
        acc_sc[n] = alpha * acc_sc[n] + jnp.dot(_mxu(p), _mxu(v),
                                                preferred_element_type=jnp.float32)
        m_sc[n] = m_new

    @pl.when(ki == pl.num_programs(3) - 1)
    def _():
        # Exact divide (approx reciprocal dropped per review), single lane-dense store.
        outs = [(acc_sc[n] / l_sc[n]).astype(o_ref.dtype) for n in range(hpb)]
        o_ref[0] = outs[0] if hpb == 1 else jnp.concatenate(outs, axis=-1)


def _pick_heads_per_block(num_heads, head_dim, lane=128, cap=512):
    for d in range(1, num_heads + 1):
        if num_heads % d == 0 and (d * head_dim) % lane == 0 and d * head_dim <= cap:
            return d
    return num_heads   # tiny-head-dim fallback: whole channel axis in one block


def _pick_seq_tile(S, candidates=(512, 256, 128)):
    for c in candidates:
        if S % c == 0:
            return c
    return S           # e.g. 14x14 windows (S=196): full-extent block


def pallas_flash_mha(qkv, q_aug, k_aug, B, S, dim, num_heads, head_dim,
                     tq=None, tkv=None):
    """qkv: (B*S, 3*dim) fused activation; q_aug/k_aug: (B, nH, S, Daug) augmented
    QK^T operands.  Returns (B, S, dim) in head-major channel layout."""
    nH, hd = num_heads, head_dim
    hpb = _pick_heads_per_block(nH, hd)
    hb = nH // hpb
    Daug = q_aug.shape[-1]
    tq = tq or _pick_seq_tile(S)
    tkv = tkv or _pick_seq_tile(S)
    assert S % tq == 0 and S % tkv == 0

    qkv3 = qkv.reshape(B, S, 3 * dim)   # v fed straight from the fused qkv activation
    grid = (B, hb, S // tq, S // tkv)
    kernel = functools.partial(_flash_mha_kernel, hpb=hpb, hd=hd)
    return pl.pallas_call(
        kernel,
        out_shape=jax.ShapeDtypeStruct((B, S, dim), qkv.dtype),
        grid_spec=pltpu.PrefetchScalarGridSpec(
            num_scalar_prefetch=0,
            grid=grid,
            in_specs=[
                pl.BlockSpec((1, hpb, tq, Daug), lambda b, j, qi, ki: (b, j, qi, 0)),
                pl.BlockSpec((1, hpb, tkv, Daug), lambda b, j, qi, ki: (b, j, ki, 0)),
                pl.BlockSpec((1, tkv, hpb * hd),
                             lambda b, j, qi, ki: (b, ki, 2 * hb + j)),
            ],
            out_specs=pl.BlockSpec((1, tq, hpb * hd), lambda b, j, qi, ki: (b, qi, j)),
            scratch_shapes=[pltpu.VMEM((hpb, tq, 1), jnp.float32),    # running max
                            pltpu.VMEM((hpb, tq, 1), jnp.float32),    # running sum
                            pltpu.VMEM((hpb, tq, hd), jnp.float32)],  # accumulator
        ),
        compiler_params=pltpu.CompilerParams(
            dimension_semantics=("parallel", "parallel", "parallel", "arbitrary"),
            vmem_limit_bytes=_vmem_limit_bytes()),
    )(q_aug, k_aug, qkv3)


# ----------------------------- rel-pos glue / augmented operand assembly -----------------------------

def get_rel_pos_jax(q_size, k_size, rel_pos):
    max_rel_dist = int(2 * max(q_size, k_size) - 1)
    # TODO(synk): F.interpolate(mode='linear') resize branch not implemented; SAM builds
    # rel_pos with length 2*size-1 so this branch is never taken.
    assert rel_pos.shape[0] == max_rel_dist
    q_coords = np.arange(q_size)[:, None] * max(k_size / q_size, 1.0)
    k_coords = np.arange(k_size)[None, :] * max(q_size / k_size, 1.0)
    relative_coords = (q_coords - k_coords) + (k_size - 1) * max(q_size / k_size, 1.0)
    return jnp.take(rel_pos, jnp.asarray(relative_coords.astype(np.int64)), axis=0)


def _build_augmented_qk(qkv, params, B, H, W, dim, num_heads, head_dim, use_rel_pos):
    """Per-head augmented QK^T operands fusing the decomposed rel-pos bias into the
    attention contraction:
        lhs[b,n,s,:] = [ q           | rel_h(s,.)    | rel_w(s,.)   | 0-pad ]
        rhs[b,n,t,:] = [ k * scale   | onehot(t//W)  | onehot(t%W)  | 0-pad ]
    so  lhs @ rhs^T = scale * q.k^T + rel_h[s, t//W] + rel_w[s, t%W]."""
    # TODO(synk): this assembly is a plain-XLA pass over q/k; fold it into the qkv
    # pallas_linear epilogue (or compute the per-kv-tile bias in-kernel) to remove an
    # extra HBM round trip on the S=4096 global layers.
    nH, hd = num_heads, head_dim
    S = H * W
    scale = hd ** -0.5
    q = qkv[:, :dim].reshape(B, S, nH, hd).transpose(0, 2, 1, 3)           # (B, nH, S, hd)
    k = qkv[:, dim:2 * dim].reshape(B, S, nH, hd).transpose(0, 2, 1, 3)    # (B, nH, S, hd)
    k = k * jnp.asarray(scale, k.dtype)
    if not use_rel_pos:
        return q, k

    Rh = get_rel_pos_jax(H, H, params['rel_pos_h'])     # (H, H, hd)
    Rw = get_rel_pos_jax(W, W, params['rel_pos_w'])     # (W, W, hd)
    rq = q.reshape(B, nH, H, W, hd)
    rel_h = jnp.einsum('bnhwc,hkc->bnhwk', rq, Rh).reshape(B, nH, S, H)
    rel_w = jnp.einsum('bnhwc,wkc->bnhwk', rq, Rw).reshape(B, nH, S, W)

    t = np.arange(S)
    one_h = (t[:, None] // W == np.arange(H)[None, :]).astype(np.float32)  # (S, H)
    one_w = (t[:, None] % W == np.arange(W)[None, :]).astype(np.float32)   # (S, W)
    ones = jnp.asarray(np.concatenate([one_h, one_w], axis=-1), q.dtype)   # (S, H+W)
    ones = jnp.broadcast_to(ones, (B, nH, S, H + W))

    d_raw = hd + H + W
    d_aug = -(-d_raw // 128) * 128      # pad contraction depth to a lane-dense 128 multiple
    pads = [jnp.zeros((B, nH, S, d_aug - d_raw), q.dtype)] if d_aug > d_raw else []
    q_aug = jnp.concatenate([q, rel_h.astype(q.dtype), rel_w.astype(q.dtype)] + pads, axis=-1)
    k_aug = jnp.concatenate([k, ones] + pads, axis=-1)
    return q_aug, k_aug


# ----------------------------- full module forward -----------------------------

def attention_forward(x, params, num_heads, use_rel_pos, tq=None, tkv=None):
    B, H, W, dim = x.shape
    hd = dim // num_heads
    S = H * W
    N = B * S

    qkv = pallas_linear(x.reshape(N, dim), params['qkv_w_t'], params['qkv_b'])   # (N, 3*dim)
    q_aug, k_aug = _build_augmented_qk(qkv, params, B, H, W, dim, num_heads, hd, use_rel_pos)
    out = pallas_flash_mha(qkv, q_aug, k_aug, B, S, dim, num_heads, hd, tq=tq, tkv=tkv)
    y = pallas_linear(out.reshape(N, dim), params['proj_w_t'], params['proj_b'])
    return y.reshape(B, H, W, dim)


# ----------------------------- pure-JAX reference (mirrors the PyTorch code) -----------------------------

def attention_reference(x, params, num_heads, use_rel_pos):
    B, H, W, dim = x.shape
    head_dim = dim // num_heads
    scale = head_dim ** -0.5
    S = H * W
    qkv = x.reshape(B * S, dim) @ params['qkv_w_t'] + params['qkv_b'][0]
    qkv = qkv.reshape(B, S, 3, num_heads, head_dim)
    qkv = jnp.transpose(qkv, (2, 0, 3, 1, 4)).reshape(3, B * num_heads, S, head_dim)
    q, k, v = qkv[0], qkv[1], qkv[2]
    attn = (q * scale) @ jnp.swapaxes(k, -2, -1)
    if use_rel_pos:
        Rh = get_rel_pos_jax(H, H, params['rel_pos_h'])
        Rw = get_rel_pos_jax(W, W, params['rel_pos_w'])
        r_q = q.reshape(B * num_heads, H, W, head_dim)
        rel_h = jnp.einsum('bhwc,hkc->bhwk', r_q, Rh)
        rel_w = jnp.einsum('bhwc,wkc->bhwk', r_q, Rw)
        attn = (attn.reshape(B * num_heads, H, W, H, W)
                + rel_h[:, :, :, :, None] + rel_w[:, :, :, None, :]).reshape(B * num_heads, S, S)
    attn = jax.nn.softmax(attn, axis=-1)
    out = (attn @ v).reshape(B, num_heads, H, W, head_dim)
    out = jnp.transpose(out, (0, 2, 3, 1, 4)).reshape(B * S, dim)
    y = out @ params['proj_w_t'] + params['proj_b'][0]
    return y.reshape(B, H, W, dim)


if __name__ == "__main__":
    B, H, W = 2, 16, 16
    dim, num_heads = 256, 4            # head_dim = 64 (SAM-like); 2 heads/block -> 128-lane blocks
    head_dim = dim // num_heads

    key = jax.random.PRNGKey(0)
    k1, k2, k3, k4, k5, k6, k7 = jax.random.split(key, 7)
    params = {
        # stored pre-transposed: torch Linear computes x @ W.T + b, so qkv_w_t = W.T
        'qkv_w_t':   jax.random.normal(k1, (dim, 3 * dim), jnp.float32) * 0.05,
        'qkv_b':     jax.random.normal(k2, (1, 3 * dim), jnp.float32) * 0.05,
        'proj_w_t':  jax.random.normal(k3, (dim, dim), jnp.float32) * 0.05,
        'proj_b':    jax.random.normal(k4, (1, dim), jnp.float32) * 0.05,
        # nn.Parameter(torch.zeros(2*H-1, head_dim)) — randomized so the rel-pos path is exercised
        'rel_pos_h': jax.random.normal(k5, (2 * H - 1, head_dim), jnp.float32) * 0.05,
        'rel_pos_w': jax.random.normal(k6, (2 * W - 1, head_dim), jnp.float32) * 0.05,
    }
    x = jax.random.normal(k7, (B, H, W, dim), jnp.float32)

    # tq=tkv=128 with S=256 exercises the multi-step online-softmax path: grid (2, 2, 2, 2).
    out = attention_forward(x, params, num_heads, use_rel_pos=True, tq=128, tkv=128)
    out = jax.block_until_ready(out)

    ref = attention_reference(x, params, num_heads, use_rel_pos=True)
    assert out.shape == (B, H, W, dim)
    # Tolerance covers bf16 MXU operands (with f32 accumulation) vs. the f32 reference.
    if not bool(jnp.allclose(out, ref, atol=5e-2, rtol=5e-2)):
        raise AssertionError(
            f"mismatch vs reference: max abs diff {float(jnp.max(jnp.abs(out - ref)))}")
    print("KERNEL_OK")
</pallas_src>

<mosaic_0001>
module attributes {stable_mosaic.version = 11 : i64} {
  func.func @_linear_kernel(%arg0: i32, %arg1: i32, %arg2: i32, %arg3: memref<512x256xf32, #tpu.memory_space<vmem>>, %arg4: memref<256x256xf32, #tpu.memory_space<vmem>>, %arg5: memref<1x256xf32, #tpu.memory_space<vmem>>, %arg6: memref<512x256xf32, #tpu.memory_space<vmem>>, %arg7: memref<512x256xf32, #tpu.memory_space<vmem>>) attributes {dimension_semantics = [#tpu.dimension_semantics<parallel>, #tpu.dimension_semantics<parallel>, #tpu.dimension_semantics<arbitrary>], iteration_bounds = array<i64: 1, 3, 1>, scalar_prefetch = 0 : i64, scratch_operands = 1 : i64, tpu.core_type = #tpu.core_type<tc>, window_params = [{transform_indices = @transform_0, window_bounds = array<i64: 512, 256>}, {transform_indices = @transform_1, window_bounds = array<i64: 256, 256>}, {transform_indices = @transform_2, window_bounds = array<i64: 1, 256>}, {transform_indices = @transform_3, window_bounds = array<i64: 512, 256>}]} {
    %c0_i32 = arith.constant 0 : i32
    %0 = arith.cmpi eq, %arg2, %c0_i32 : i32
    %1 = arith.extui %0 : i1 to i32
    %c0_i32_0 = arith.constant 0 : i32
    %2 = arith.cmpi ne, %1, %c0_i32_0 : i32
    scf.if %2 {
      %cst_10 = arith.constant 0.000000e+00 : f32
      %14 = vector.broadcast %cst_10 : f32 to vector<512x256xf32>
      %c0_11 = arith.constant 0 : index
      %c0_12 = arith.constant 0 : index
      %15 = vector.load %arg7[%c0_11, %c0_12] : memref<512x256xf32, #tpu.memory_space<vmem>>, vector<512x256xf32>
      tpu.vector_store %arg7[%c0_11, %c0_12], %14 {strides = array<i32>} : memref<512x256xf32, #tpu.memory_space<vmem>>, vector<512x256xf32>,
    } else {
    }
    %c0 = arith.constant 0 : index
    %c0_1 = arith.constant 0 : index
    %3 = vector.load %arg7[%c0, %c0_1] : memref<512x256xf32, #tpu.memory_space<vmem>>, vector<512x256xf32>
    %c0_2 = arith.constant 0 : index
    %c0_3 = arith.constant 0 : index
    %4 = vector.load %arg3[%c0_2, %c0_3] : memref<512x256xf32, #tpu.memory_space<vmem>>, vector<512x256xf32>
    %5 = arith.truncf %4 : vector<512x256xf32> to vector<512x256xbf16>
    %c0_4 = arith.constant 0 : index
    %c0_5 = arith.constant 0 : index
    %6 = vector.load %arg4[%c0_4, %c0_5] : memref<256x256xf32, #tpu.memory_space<vmem>>, vector<256x256xf32>
    %7 = arith.truncf %6 : vector<256x256xf32> to vector<256x256xbf16>
    %cst = arith.constant dense<0.000000e+00> : vector<512x256xf32>
    %8 = tpu.matmul %5, %7, %cst {dimension_numbers = #tpu.dot_dimension_numbers<[1], [0], [0], [1], [0, 0, 1, 1], [], []>} : vector<512x256xbf16>, vector<256x256xbf16>, vector<512x256xf32> -> vector<512x256xf32>
    %9 = arith.addf %3, %8 : vector<512x256xf32>
    %c0_6 = arith.constant 0 : index
    %c0_7 = arith.constant 0 : index
    %10 = vector.load %arg7[%c0_6, %c0_7] : memref<512x256xf32, #tpu.memory_space<vmem>>, vector<512x256xf32>
    tpu.vector_store %arg7[%c0_6, %c0_7], %9 {strides = array<i32>} : memref<512x256xf32, #tpu.memory_space<vmem>>, vector<512x256xf32>,
    %c0_i32_8 = arith.constant 0 : i32
    %11 = arith.cmpi eq, %arg2, %c0_i32_8 : i32
    %12 = arith.extui %11 : i1 to i32
    %c0_i32_9 = arith.constant 0 : i32
    %13 = arith.cmpi ne, %12, %c0_i32_9 : i32
    scf.if %13 {
      %c0_10 = arith.constant 0 : index
      %c0_11 = arith.constant 0 : index
      %14 = vector.load %arg7[%c0_10, %c0_11] : memref<512x256xf32, #tpu.memory_space<vmem>>, vector<512x256xf32>
      %c0_12 = arith.constant 0 : index
      %c0_13 = arith.constant 0 : index
      %15 = vector.load %arg5[%c0_12, %c0_13] : memref<1x256xf32, #tpu.memory_space<vmem>>, vector<1x256xf32>
      %16 = vector.broadcast %15 : vector<1x256xf32> to vector<512x256xf32>
      %17 = arith.addf %14, %16 : vector<512x256xf32>
      %c0_14 = arith.constant 0 : index
      %c0_15 = arith.constant 0 : index
      %18 = vector.load %arg6[%c0_14, %c0_15] : memref<512x256xf32, #tpu.memory_space<vmem>>, vector<512x256xf32>
      tpu.vector_store %arg6[%c0_14, %c0_15], %17 {strides = array<i32>} : memref<512x256xf32, #tpu.memory_space<vmem>>, vector<512x256xf32>,
    } else {
    }
    return
  }
  func.func @transform_0(%arg0: i32, %arg1: i32, %arg2: i32) -> (i32, i32) {
    %c0_i32 = arith.constant 0 : i32
    return %arg0, %arg2 : i32, i32
  }
  func.func @transform_1(%arg0: i32, %arg1: i32, %arg2: i32) -> (i32, i32) {
    %c0_i32 = arith.constant 0 : i32
    return %arg2, %arg1 : i32, i32
  }
  func.func @transform_2(%arg0: i32, %arg1: i32, %arg2: i32) -> (i32, i32) {
    %c0_i32 = arith.constant 0 : i32
    %c0_i32_0 = arith.constant 0 : i32
    return %c0_i32, %arg1 : i32, i32
  }
  func.func @transform_3(%arg0: i32, %arg1: i32, %arg2: i32) -> (i32, i32) {
    %c0_i32 = arith.constant 0 : i32
    return %arg0, %arg1 : i32, i32
  }
}

</mosaic_0001>

<llo_original>
// kernel: tpu_custom_call.1
$region0: #{tpu_custom_call.1}
  #allocation0 [shape = 'u32[]', space=smem, size = 0x4, offset = 0x4, fixed_abs, tag = 'smem constant byte address 0x4 - core index']
  #allocation1 [shape = 'u32[144,128]{1,0:T(1,128)}', space=vmem, size = 0x12000, scoped, tag = 'internal scratch']
  #allocation2 [shape = 'f32[512,256]{1,0:T(8,128)}', space=vmem, size = 0x80000, scoped, tag = 'scratch operand']
  %s0 = inlined_call_operand.hbm [shape: f32[512,256], index: 0, kind: input, shape index: {}]
  %s1 = inlined_call_operand.hbm [shape: f32[256,768], index: 1, kind: input, shape index: {}]
  %s2 = inlined_call_operand.hbm [shape: f32[1,768], index: 2, kind: input, shape index: {}]
  %s3 = inlined_call_operand.hbm [shape: f32[512,768], index: 3, kind: output, shape index: {}]
  %s4 = sld [smem:[#allocation0]]
  $region65: #{tpu_custom_call.1} parent=0
    _
  %s6 = ssub.s32 1, %s4
  %s7 = scalar_select 0, %s6, %s4
  $region1: #{tpu_custom_call.1} parent=0
    #allocation3 [shape = 'u8[524288]{0}', space=vmem, size = 0x80000, scoped, tag = 'input window, operand 0, single buffered']
    #allocation4 [shape = 's32[2]{0}', space=sflag, size = 0x8, scoped, tag = 'scoped memory for tpu_custom_call.1']
    #allocation5 [shape = 's32[2]{0}', space=sflag, size = 0x8, scoped, tag = 'scoped memory for tpu_custom_call.1']
    #allocation6 [shape = 'u8[524288]{0}', space=vmem, size = 0x80000, scoped, tag = 'input window, operand 1']
    #allocation7 [shape = 's32[2]{0}', space=sflag, size = 0x8, scoped, tag = 'scoped memory for tpu_custom_call.1']
    #allocation8 [shape = 'u8[2048]{0}', space=vmem, size = 0x800, scoped, tag = 'input window, operand 2']
    #allocation9 [shape = 'u8[1048576]{0}', space=vmem, size = 0x100000, scoped, tag = 'output window, operand 0']
    %8 = vsyncpa [#allocation4], 0
    %9 = vsyncpa [#allocation7], 0
    %s10 = scalar_lea.sflag [#allocation7], 1
    %11 = vsyncpa %s10, 0
    %12 = vsyncpa [#allocation5], 0
    %s13 = scalar_lea.sflag [#allocation5], 1
    %14 = vsyncpa %s13, 0
    loop: start=0, step=1, limit=5
    $region2: #{tpu_custom_call.1} parent=1 // loop_pre_header
      _
    $region3: #{tpu_custom_call.1} parent=1 // loop_header
      %s16 = sphi 0, %s20
      %p17 = scmp.ge.s32.totalorder %s16, 5
      %s23 = sphi 0, %s42
      %s24 = sphi 0, %s38
      %s25 = sphi 0, %s34
      %s26 = sphi 0, %s23
      %s27 = sphi 0, %s24
      %s28 = sphi 0, %s25
      %s29 = sphi 0, %s26
      %s30 = sphi 0, %s27
      %s31 = sphi 0, %s28
      %s47 = sphi 0, %s49
      %s50 = sphi 0, %s47
      %s51 = sphi 0, %s50
      %s67 = sphi 0, %s51
      %s75 = sphi 0, %s77
      %s78 = sphi 0, %s75
      %s79 = sphi 0, %s78
      %s95 = sphi 0, %s79
      %s101 = sphi 0, %s103
      %s104 = sphi 0, %s101
      %s105 = sphi 0, %s104
      %s121 = sphi 0, %s105
      %s129 = sphi 0, %s131
      %s132 = sphi 0, %s129
      %s133 = sphi 0, %s132
      %s149 = sphi 0, %s133
    $region4: #{tpu_custom_call.1} parent=1 // loop_header_branch
      %19 = sbr.rel (%p17) target = $region8
    $region5: #{tpu_custom_call.1} parent=1 // loop_body
      %s21 = ssub.s32 %s16, 1
      %s22 = ssub.s32 %s16, 2
      %s32 = sadd.s32 1, %s25
      %p33 = scmp.ge.s32.totalorder %s32, 1
      %s34 = scalar_select %p33, 0, %s32
      %s35 = sadd.s32 1, %s24
      %s36 = scalar_select %p33, %s35, %s24
      %p37 = scmp.ge.s32.totalorder %s36, 3
      %s38 = scalar_select %p37, 0, %s36
      %s39 = sadd.s32 1, %s23
      %s40 = scalar_select %p37, %s39, %s23
      %p41 = scmp.ge.s32.totalorder %s40, 1
      %s42 = scalar_select %p41, 0, %s40
      %s43 = ssub.s32 %s23, %s42
      %s44 = ssub.s32 %s25, %s34
      %s45 = sor.u32 %s43, %s44
      %p46 = scmp.eq.s32.totalorder %s45, 0
      %s48 = sadd.s32 %s47, 1
      %s49 = scalar_select %p46, %s47, %s48
      %p52 = pneg %p46
      %p53 = scmp.eq.s32.totalorder %s16, 2
      %p54 = por %p52, %p53
      %p55 = scmp.ne.s32.totalorder %s47, %s50
      %p56 = scmp.eq.s32.totalorder %s16, 0
      %p57 = por %p55, %p56
      %p58 = scmp.ne.s32.totalorder %s47, %s50
      %p59 = scmp.eq.s32.totalorder %s21, 2
      %p60 = por %p58, %p59
      %p61 = scmp.ne.s32.totalorder %s50, %s51
      %p62 = scmp.eq.s32.totalorder %s21, 0
      %p63 = por %p61, %p62
      %p64 = scmp.ne.s32.totalorder %s50, %s51
      %p65 = scmp.eq.s32.totalorder %s22, 2
      %p66 = por %p64, %p65
      %p68 = scmp.ne.s32.totalorder %s51, %s67
      %p69 = scmp.eq.s32.totalorder %s22, 0
      %p70 = por %p68, %p69
      %s71 = ssub.s32 %s25, %s34
      %s72 = ssub.s32 %s24, %s38
      %s73 = sor.u32 %s71, %s72
      %p74 = scmp.eq.s32.totalorder %s73, 0
      %s76 = sadd.s32 %s75, 1
      %s77 = scalar_select %p74, %s75, %s76
      %p80 = pneg %p74
      %p81 = scmp.eq.s32.totalorder %s16, 2
      %p82 = por %p80, %p81
      %p83 = scmp.ne.s32.totalorder %s75, %s78
      %p84 = scmp.eq.s32.totalorder %s16, 0
      %p85 = por %p83, %p84
      %p86 = scmp.ne.s32.totalorder %s75, %s78
      %p87 = scmp.eq.s32.totalorder %s21, 2
      %p88 = por %p86, %p87
      %p89 = scmp.ne.s32.totalorder %s78, %s79
      %p90 = scmp.eq.s32.totalorder %s21, 0
      %p91 = por %p89, %p90
      %p92 = scmp.ne.s32.totalorder %s78, %s79
      %p93 = scmp.eq.s32.totalorder %s22, 2
      %p94 = por %p92, %p93
      %p96 = scmp.ne.s32.totalorder %s79, %s95
      %p97 = scmp.eq.s32.totalorder %s22, 0
      %p98 = por %p96, %p97
      %s99 = ssub.s32 %s24, %s38
      %p100 = scmp.eq.s32.totalorder %s99, 0
      %s102 = sadd.s32 %s101, 1
      %s103 = scalar_select %p100, %s101, %s102
      %p106 = pneg %p100
      %p107 = scmp.eq.s32.totalorder %s16, 2
      %p108 = por %p106, %p107
      %p109 = scmp.ne.s32.totalorder %s101, %s104
      %p110 = scmp.eq.s32.totalorder %s16, 0
      %p111 = por %p109, %p110
      %p112 = scmp.ne.s32.totalorder %s101, %s104
      %p113 = scmp.eq.s32.totalorder %s21, 2
      %p114 = por %p112, %p113
      %p115 = scmp.ne.s32.totalorder %s104, %s105
      %p116 = scmp.eq.s32.totalorder %s21, 0
      %p117 = por %p115, %p116
      %p118 = scmp.ne.s32.totalorder %s104, %s105
      %p119 = scmp.eq.s32.totalorder %s22, 2
      %p120 = por %p118, %p119
      %p122 = scmp.ne.s32.totalorder %s105, %s121
      %p123 = scmp.eq.s32.totalorder %s22, 0
      %p124 = por %p122, %p123
      %s125 = ssub.s32 %s23, %s42
      %s126 = ssub.s32 %s24, %s38
      %s127 = sor.u32 %s125, %s126
      %p128 = scmp.eq.s32.totalorder %s127, 0
      %s130 = sadd.s32 %s129, 1
      %s131 = scalar_select %p128, %s129, %s130
      %p134 = pneg %p128
      %p135 = scmp.eq.s32.totalorder %s16, 2
      %p136 = por %p134, %p135
      %p137 = scmp.ne.s32.totalorder %s129, %s132
      %p138 = scmp.eq.s32.totalorder %s16, 0
      %p139 = por %p137, %p138
      %p140 = scmp.ne.s32.totalorder %s129, %s132
      %p141 = scmp.eq.s32.totalorder %s21, 2
      %p142 = por %p140, %p141
      %p143 = scmp.ne.s32.totalorder %s132, %s133
      %p144 = scmp.eq.s32.totalorder %s21, 0
      %p145 = por %p143, %p144
      %p146 = scmp.ne.s32.totalorder %s132, %s133
      %p147 = scmp.eq.s32.totalorder %s22, 2
      %p148 = por %p146, %p147
      %p150 = scmp.ne.s32.totalorder %s133, %s149
      %p151 = scmp.eq.s32.totalorder %s22, 0
      %p152 = por %p150, %p151
      %p153 = scmp.le.s32.totalorder 1, %s16
      %p154 = scmp.lt.s32.totalorder %s16, 4
      %p155 = pnand %p153, %p154
      %p156 = pneg %p155
      // Predicated region
      $region9: #{tpu_custom_call.1} parent=5 // pred_check
        _
      $region10: #{tpu_custom_call.1} parent=5 // pred_check_branch
        %158 = sbr.rel (%p155) target = $region12
      $region11: #{tpu_custom_call.1} parent=5 // pred_region
        %s159 = ssub.s32 %s16, 1
        // Predicated region
        $region13: #{tpu_custom_call.1} parent=11 // pred_check
          %p160 = pneg %p63
        $region14: #{tpu_custom_call.1} parent=11 // pred_check_branch
          %162 = sbr.rel (%p160) target = $region16
        $region15: #{tpu_custom_call.1} parent=11 // pred_region
          %s163 = smul.u32 64, %s26
          %s164 = smul.u32 2, %s28
          %s166 = ssub.s32 16384, 16384
          %167 = vsyncadd [#allocation4], %s166
          %s168 = smul.addr %s163, 2
          %s169 = sadd.s32 %s164, %s168
          %s170 = smul.addr %s169, 128
          %s171 = scalar_lea.hbm %s0, %s170
          %s172 = sshll.u32 [#allocation3], 4
          %s173 = int_to_ptr.vmem [resolvable:$true] %s172
          %178 = dma.hbm_to_vmem [thread:$0]  %s171, 16384, %s173, [#allocation4], 256, 256, 16
        $region16: #{tpu_custom_call.1} parent=11 // pred_fallthru
          _
      $region12: #{tpu_custom_call.1} parent=5 // pred_fallthru
        _
      %p179 = scmp.lt.s32.totalorder %s16, 3
      // Predicated region
      $region17: #{tpu_custom_call.1} parent=5 // pred_check
        %p180 = pneg %p179
      $region18: #{tpu_custom_call.1} parent=5 // pred_check_branch
        %182 = sbr.rel (%p180) target = $region20
      $region19: #{tpu_custom_call.1} parent=5 // pred_region
        // Predicated region
        $region21: #{tpu_custom_call.1} parent=19 // pred_check
          %p183 = pneg %p85
        $region22: #{tpu_custom_call.1} parent=19 // pred_check_branch
          %185 = sbr.rel (%p183) target = $region24
        $region23: #{tpu_custom_call.1} parent=19 // pred_region
          %s186 = sand.u32 %s16, 1
          %s187 = scalar_lea.sflag [#allocation7], %s186
          %s188 = sand.u32 %s75, 1
          %s189 = smul.addr %s188, 512
          %s190 = scalar_lea.vmem [#allocation6], %s189
          %s191 = smul.u32 32, %s25
          %s192 = smul.u32 2, %s24
          %s194 = ssub.s32 8192, 8192
          %195 = vsyncadd %s187, %s194
          %s196 = smul.addr %s191, 6
          %s197 = sadd.s32 %s192, %s196
          %s198 = smul.addr %s197, 128
          %s199 = scalar_lea.hbm %s1, %s198
          %s200 = sshll.u32 %s190, 4
          %s201 = int_to_ptr.vmem [resolvable:$true] %s200
          %206 = dma.hbm_to_vmem [thread:$0]  %s199, 8192, %s201, %s187, 768, 256, 16
        $region24: #{tpu_custom_call.1} parent=19 // pred_fallthru
          _
        // Predicated region
        $region25: #{tpu_custom_call.1} parent=19 // pred_check
          %p207 = pneg %p111
        $region26: #{tpu_custom_call.1} parent=19 // pred_check_branch
          %209 = sbr.rel (%p207) target = $region28
        $region27: #{tpu_custom_call.1} parent=19 // pred_region
          %s210 = sand.u32 %s16, 1
          %s211 = scalar_lea.sflag [#allocation7], %s210
          %s212 = sand.u32 %s101, 1
          %s213 = smul.addr %s212, 2
          %s214 = scalar_lea.vmem [#allocation8], %s213
          %s215 = smul.u32 2, %s24
          %s217 = ssub.s32 32, 32
          %218 = vsyncadd %s211, %s217
          %s219 = smul.addr %s215, 16
          %s220 = scalar_lea.hbm %s2, %s219
          %s222 = sshll.u32 %s214, 4
          %s223 = int_to_ptr.vmem [resolvable:$true] %s222
          %225 = dma.hbm_to_vmem [thread:$0]  %s220, 32, %s223, %s211
        $region28: #{tpu_custom_call.1} parent=19 // pred_fallthru
          _
      $region20: #{tpu_custom_call.1} parent=5 // pred_fallthru
        _
      %p226 = scmp.le.s32.totalorder 1, %s16
      %p227 = scmp.lt.s32.totalorder %s16, 4
      %p228 = pnand %p226, %p227
      %p229 = pneg %p228
      // Predicated region
      $region29: #{tpu_custom_call.1} parent=5 // pred_check
        _
      $region30: #{tpu_custom_call.1} parent=5 // pred_check_branch
        %231 = sbr.rel (%p228) target = $region32
      $region31: #{tpu_custom_call.1} parent=5 // pred_region
        %s232 = ssub.s32 %s16, 1
        // Predicated region
        $region33: #{tpu_custom_call.1} parent=31 // pred_check
          %p233 = pneg %p63
        $region34: #{tpu_custom_call.1} parent=31 // pred_check_branch
          %235 = sbr.rel (%p233) target = $region36
        $region35: #{tpu_custom_call.1} parent=31 // pred_region
          %236 = dma.done [#allocation4], 16384
        $region36: #{tpu_custom_call.1} parent=31 // pred_fallthru
          _
        %s237 = sand.u32 %s21, 1
        %s238 = scalar_lea.sflag [#allocation7], %s237
        %s239 = sand.u32 %s78, 1
        %s240 = smul.addr %s239, 512
        %s241 = scalar_lea.vmem [#allocation6], %s240
        // Predicated region
        $region37: #{tpu_custom_call.1} parent=31 // pred_check
          %p242 = pneg %p91
        $region38: #{tpu_custom_call.1} parent=31 // pred_check_branch
          %244 = sbr.rel (%p242) target = $region40
        $region39: #{tpu_custom_call.1} parent=31 // pred_region
          %245 = dma.done %s238, 8192
        $region40: #{tpu_custom_call.1} parent=31 // pred_fallthru
          _
        %s246 = sand.u32 %s21, 1
        %s247 = scalar_lea.sflag [#allocation7], %s246
        %s248 = sand.u32 %s104, 1
        %s249 = smul.addr %s248, 2
        %s250 = scalar_lea.vmem [#allocation8], %s249
        // Predicated region
        $region41: #{tpu_custom_call.1} parent=31 // pred_check
          %p251 = pneg %p117
        $region42: #{tpu_custom_call.1} parent=31 // pred_check_branch
          %253 = sbr.rel (%p251) target = $region44
        $region43: #{tpu_custom_call.1} parent=31 // pred_region
          %254 = dma.done %s247, 32
        $region44: #{tpu_custom_call.1} parent=31 // pred_fallthru
          _
        %p255 = pneg %p63
        %p256 = pneg %p60
        %s257 = sand.u32 %s21, 1
        %s258 = scalar_lea.sflag [#allocation7], %s257
        %s259 = sand.u32 %s78, 1
        %s260 = smul.addr %s259, 512
        %s261 = scalar_lea.vmem [#allocation6], %s260
        %p262 = pneg %p91
        %p263 = pneg %p88
        %s264 = sand.u32 %s21, 1
        %s265 = scalar_lea.sflag [#allocation7], %s264
        %s266 = sand.u32 %s104, 1
        %s267 = smul.addr %s266, 2
        %s268 = scalar_lea.vmem [#allocation8], %s267
        %p269 = pneg %p117
        %p270 = pneg %p114
        %p271 = pneg %p145
        %p272 = pneg %p142
        %s273 = sand.u32 %s132, 1
        %s274 = scalar_lea.sflag [#allocation5], %s273
        %s275 = sand.u32 %s132, 1
        %s276 = smul.addr %s275, 1024
        %s277 = scalar_lea.vmem [#allocation9], %s276
        %s278 = smul.u32 64, %s26
        %s279 = smul.u32 2, %s28
        %s280 = smul.u32 32, %s28
        %s281 = smul.u32 2, %s27
        %s282 = smul.u32 2, %s27
        %s283 = smul.u32 64, %s26
        %s284 = smul.u32 2, %s27
        %p285 = scmp.eq.s32.totalorder %s28, 0
        // Predicated region
        $region45: #{tpu_custom_call.1} parent=31 // pred_check
          %p286 = pneg %p285
        $region46: #{tpu_custom_call.1} parent=31 // pred_check_branch
          %288 = sbr.rel (%p286) target = $region48
        $region47: #{tpu_custom_call.1} parent=31 // pred_region
          %289 = vst [vmem:[#allocation2] sm:$0xff] 0.0
          %290 = vst [vmem:[#allocation2 + $0x8] sm:$0xff] 0.0
          %291 = vst [vmem:[#allocation2 + $0x10] sm:$0xff] 0.0
          %292 = vst [vmem:[#allocation2 + $0x18] sm:$0xff] 0.0
          %293 = vst [vmem:[#allocation2 + $0x20] sm:$0xff] 0.0
          %294 = vst [vmem:[#allocation2 + $0x28] sm:$0xff] 0.0
          %295 = vst [vmem:[#allocation2 + $0x30] sm:$0xff] 0.0
          %296 = vst [vmem:[#allocation2 + $0x38] sm:$0xff] 0.0
          %297 = vst [vmem:[#allocation2 + $0x40] sm:$0xff] 0.0
          %298 = vst [vmem:[#allocation2 + $0x48] sm:$0xff] 0.0
          %299 = vst [vmem:[#allocation2 + $0x50] sm:$0xff] 0.0
          %300 = vst [vmem:[#allocation2 + $0x58] sm:$0xff] 0.0
          %301 = vst [vmem:[#allocation2 + $0x60] sm:$0xff] 0.0
          %302 = vst [vmem:[#allocation2 + $0x68] sm:$0xff] 0.0
          %303 = vst [vmem:[#allocation2 + $0x70] sm:$0xff] 0.0
          %304 = vst [vmem:[#allocation2 + $0x78] sm:$0xff] 0.0
          %305 = vst [vmem:[#allocation2 + $0x80] sm:$0xff] 0.0
          %306 = vst [vmem:[#allocation2 + $0x88] sm:$0xff] 0.0
          %307 = vst [vmem:[#allocation2 + $0x90] sm:$0xff] 0.0
          %308 = vst [vmem:[#allocation2 + $0x98] sm:$0xff] 0.0
          %309 = vst [vmem:[#allocation2 + $0xa0] sm:$0xff] 0.0
          %310 = vst [vmem:[#allocation2 + $0xa8] sm:$0xff] 0.0
          %311 = vst [vmem:[#allocation2 + $0xb0] sm:$0xff] 0.0
          %312 = vst [vmem:[#allocation2 + $0xb8] sm:$0xff] 0.0
          %313 = vst [vmem:[#allocation2 + $0xc0] sm:$0xff] 0.0
          %314 = vst [vmem:[#allocation2 + $0xc8] sm:$0xff] 0.0
          %315 = vst [vmem:[#allocation2 + $0xd0] sm:$0xff] 0.0
          %316 = vst [vmem:[#allocation2 + $0xd8] sm:$0xff] 0.0
          %317 = vst [vmem:[#allocation2 + $0xe0] sm:$0xff] 0.0
          %318 = vst [vmem:[#allocation2 + $0xe8] sm:$0xff] 0.0
          %319 = vst [vmem:[#allocation2 + $0xf0] sm:$0xff] 0.0
          %320 = vst [vmem:[#allocation2 + $0xf8] sm:$0xff] 0.0
          %321 = vst [vmem:[#allocation2 + $0x100] sm:$0xff] 0.0
          %322 = vst [vmem:[#allocation2 + $0x108] sm:$0xff] 0.0
          %323 = vst [vmem:[#allocation2 + $0x110] sm:$0xff] 0.0
          %324 = vst [vmem:[#allocation2 + $0x118] sm:$0xff] 0.0
          %325 = vst [vmem:[#allocation2 + $0x120] sm:$0xff] 0.0
          %326 = vst [vmem:[#allocation2 + $0x128] sm:$0xff] 0.0
          %327 = vst [vmem:[#allocation2 + $0x130] sm:$0xff] 0.0
          %328 = vst [vmem:[#allocation2 + $0x138] sm:$0xff] 0.0
          %329 = vst [vmem:[#allocation2 + $0x140] sm:$0xff] 0.0
          %330 = vst [vmem:[#allocation2 + $0x148] sm:$0xff] 0.0
          %331 = vst [vmem:[#allocation2 + $0x150] sm:$0xff] 0.0
          %332 = vst [vmem:[#allocation2 + $0x158] sm:$0xff] 0.0
          %333 = vst [vmem:[#allocation2 + $0x160] sm:$0xff] 0.0
          %334 = vst [vmem:[#allocation2 + $0x168] sm:$0xff] 0.0
          %335 = vst [vmem:[#allocation2 + $0x170] sm:$0xff] 0.0
          %336 = vst [vmem:[#allocation2 + $0x178] sm:$0xff] 0.0
          %337 = vst [vmem:[#allocation2 + $0x180] sm:$0xff] 0.0
          %338 = vst [vmem:[#allocation2 + $0x188] sm:$0xff] 0.0
          %339 = vst [vmem:[#allocation2 + $0x190] sm:$0xff] 0.0
          %340 = vst [vmem:[#allocation2 + $0x198] sm:$0xff] 0.0
          %341 = vst [vmem:[#allocation2 + $0x1a0] sm:$0xff] 0.0
          %342 = vst [vmem:[#allocation2 + $0x1a8] sm:$0xff] 0.0
          %343 = vst [vmem:[#allocation2 + $0x1b0] sm:$0xff] 0.0
          %344 = vst [vmem:[#allocation2 + $0x1b8] sm:$0xff] 0.0
          %345 = vst [vmem:[#allocation2 + $0x1c0] sm:$0xff] 0.0
          %346 = vst [vmem:[#allocation2 + $0x1c8] sm:$0xff] 0.0
          %347 = vst [vmem:[#allocation2 + $0x1d0] sm:$0xff] 0.0
          %348 = vst [vmem:[#allocation2 + $0x1d8] sm:$0xff] 0.0
          %349 = vst [vmem:[#allocation2 + $0x1e0] sm:$0xff] 0.0
          %350 = vst [vmem:[#allocation2 + $0x1e8] sm:$0xff] 0.0
          %351 = vst [vmem:[#allocation2 + $0x1f0] sm:$0xff] 0.0
          %352 = vst [vmem:[#allocation2 + $0x1f8] sm:$0xff] 0.0
          %353 = vst [vmem:[#allocation2 + $0x200] sm:$0xff] 0.0
          %354 = vst [vmem:[#allocation2 + $0x208] sm:$0xff] 0.0
          %355 = vst [vmem:[#allocation2 + $0x210] sm:$0xff] 0.0
          %356 = vst [vmem:[#allocation2 + $0x218] sm:$0xff] 0.0
          %357 = vst [vmem:[#allocation2 + $0x220] sm:$0xff] 0.0
          %358 = vst [vmem:[#allocation2 + $0x228] sm:$0xff] 0.0
          %359 = vst [vmem:[#allocation2 + $0x230] sm:$0xff] 0.0
          %360 = vst [vmem:[#allocation2 + $0x238] sm:$0xff] 0.0
          %361 = vst [vmem:[#allocation2 + $0x240] sm:$0xff] 0.0
          %362 = vst [vmem:[#allocation2 + $0x248] sm:$0xff] 0.0
          %363 = vst [vmem:[#allocation2 + $0x250] sm:$0xff] 0.0
          %364 = vst [vmem:[#allocation2 + $0x258] sm:$0xff] 0.0
          %365 = vst [vmem:[#allocation2 + $0x260] sm:$0xff] 0.0
          %366 = vst [vmem:[#allocation2 + $0x268] sm:$0xff] 0.0
          %367 = vst [vmem:[#allocation2 + $0x270] sm:$0xff] 0.0
          %368 = vst [vmem:[#allocation2 + $0x278] sm:$0xff] 0.0
          %369 = vst [vmem:[#allocation2 + $0x280] sm:$0xff] 0.0
          %370 = vst [vmem:[#allocation2 + $0x288] sm:$0xff] 0.0
          %371 = vst [vmem:[#allocation2 + $0x290] sm:$0xff] 0.0
          %372 = vst [vmem:[#allocation2 + $0x298] sm:$0xff] 0.0
          %373 = vst [vmem:[#allocation2 + $0x2a0] sm:$0xff] 0.0
          %374 = vst [vmem:[#allocation2 + $0x2a8] sm:$0xff] 0.0
          %375 = vst [vmem:[#allocation2 + $0x2b0] sm:$0xff] 0.0
          %376 = vst [vmem:[#allocation2 + $0x2b8] sm:$0xff] 0.0
          %377 = vst [vmem:[#allocation2 + $0x2c0] sm:$0xff] 0.0
          %378 = vst [vmem:[#allocation2 + $0x2c8] sm:$0xff] 0.0
          %379 = vst [vmem:[#allocation2 + $0x2d0] sm:$0xff] 0.0
          %380 = vst [vmem:[#allocation2 + $0x2d8] sm:$0xff] 0.0
          %381 = vst [vmem:[#allocation2 + $0x2e0] sm:$0xff] 0.0
          %382 = vst [vmem:[#allocation2 + $0x2e8] sm:$0xff] 0.0
          %383 = vst [vmem:[#allocation2 + $0x2f0] sm:$0xff] 0.0
          %384 = vst [vmem:[#allocation2 + $0x2f8] sm:$0xff] 0.0
          %385 = vst [vmem:[#allocation2 + $0x300] sm:$0xff] 0.0
          %386 = vst [vmem:[#allocation2 + $0x308] sm:$0xff] 0.0
          %387 = vst [vmem:[#allocation2 + $0x310] sm:$0xff] 0.0
          %388 = vst [vmem:[#allocation2 + $0x318] sm:$0xff] 0.0
          %389 = vst [vmem:[#allocation2 + $0x320] sm:$0xff] 0.0
          %390 = vst [vmem:[#allocation2 + $0x328] sm:$0xff] 0.0
          %391 = vst [vmem:[#allocation2 + $0x330] sm:$0xff] 0.0
          %392 = vst [vmem:[#allocation2 + $0x338] sm:$0xff] 0.0
          %393 = vst [vmem:[#allocation2 + $0x340] sm:$0xff] 0.0
          %394 = vst [vmem:[#allocation2 + $0x348] sm:$0xff] 0.0
          %395 = vst [vmem:[#allocation2 + $0x350] sm:$0xff] 0.0
          %396 = vst [vmem:[#allocation2 + $0x358] sm:$0xff] 0.0
          %397 = vst [vmem:[#allocation2 + $0x360] sm:$0xff] 0.0
          %398 = vst [vmem:[#allocation2 + $0x368] sm:$0xff] 0.0
          %399 = vst [vmem:[#allocation2 + $0x370] sm:$0xff] 0.0
          %400 = vst [vmem:[#allocation2 + $0x378] sm:$0xff] 0.0
          %401 = vst [vmem:[#allocation2 + $0x380] sm:$0xff] 0.0
          %402 = vst [vmem:[#allocation2 + $0x388] sm:$0xff] 0.0
          %403 = vst [vmem:[#allocation2 + $0x390] sm:$0xff] 0.0
          %404 = vst [vmem:[#allocation2 + $0x398] sm:$0xff] 0.0
          %405 = vst [vmem:[#allocation2 + $0x3a0] sm:$0xff] 0.0
          %406 = vst [vmem:[#allocation2 + $0x3a8] sm:$0xff] 0.0
          %407 = vst [vmem:[#allocation2 + $0x3b0] sm:$0xff] 0.0
          %408 = vst [vmem:[#allocation2 + $0x3b8] sm:$0xff] 0.0
          %409 = vst [vmem:[#allocation2 + $0x3c0] sm:$0xff] 0.0
          %410 = vst [vmem:[#allocation2 + $0x3c8] sm:$0xff] 0.0
          %411 = vst [vmem:[#allocation2 + $0x3d0] sm:$0xff] 0.0
          %412 = vst [vmem:[#allocation2 + $0x3d8] sm:$0xff] 0.0
          %413 = vst [vmem:[#allocation2 + $0x3e0] sm:$0xff] 0.0
          %414 = vst [vmem:[#allocation2 + $0x3e8] sm:$0xff] 0.0
          %415 = vst [vmem:[#allocation2 + $0x3f0] sm:$0xff] 0.0
          %416 = vst [vmem:[#allocation2 + $0x3f8] sm:$0xff] 0.0
        $region48: #{tpu_custom_call.1} parent=31 // pred_fallthru
          _
        %v417 = vld [vmem:[#allocation2] sm:$0xff]
        %v418 = vld [vmem:[#allocation2 + $0x8] sm:$0xff]
        %v419 = vld [vmem:[#allocation2 + $0x10] sm:$0xff]
        %v420 = vld [vmem:[#allocation2 + $0x18] sm:$0xff]
        %v421 = vld [vmem:[#allocation2 + $0x20] sm:$0xff]
        %v422 = vld [vmem:[#allocation2 + $0x28] sm:$0xff]
        %v423 = vld [vmem:[#allocation2 + $0x30] sm:$0xff]
        %v424 = vld [vmem:[#allocation2 + $0x38] sm:$0xff]
        %v425 = vld [vmem:[#allocation2 + $0x40] sm:$0xff]
        %v426 = vld [vmem:[#allocation2 + $0x48] sm:$0xff]
        %v427 = vld [vmem:[#allocation2 + $0x50] sm:$0xff]
        %v428 = vld [vmem:[#allocation2 + $0x58] sm:$0xff]
        %v429 = vld [vmem:[#allocation2 + $0x60] sm:$0xff]
        %v430 = vld [vmem:[#allocation2 + $0x68] sm:$0xff]
        %v431 = vld [vmem:[#allocation2 + $0x70] sm:$0xff]
        %v432 = vld [vmem:[#allocation2 + $0x78] sm:$0xff]
        %v433 = vld [vmem:[#allocation2 + $0x80] sm:$0xff]
        %v434 = vld [vmem:[#allocation2 + $0x88] sm:$0xff]
        %v435 = vld [vmem:[#allocation2 + $0x90] sm:$0xff]
        %v436 = vld [vmem:[#allocation2 + $0x98] sm:$0xff]
        %v437 = vld [vmem:[#allocation2 + $0xa0] sm:$0xff]
        %v438 = vld [vmem:[#allocation2 + $0xa8] sm:$0xff]
        %v439 = vld [vmem:[#allocation2 + $0xb0] sm:$0xff]
        %v440 = vld [vmem:[#allocation2 + $0xb8] sm:$0xff]
        %v441 = vld [vmem:[#allocation2 + $0xc0] sm:$0xff]
        %v442 = vld [vmem:[#allocation2 + $0xc8] sm:$0xff]
        %v443 = vld [vmem:[#allocation2 + $0xd0] sm:$0xff]
        %v444 = vld [vmem:[#allocation2 + $0xd8] sm:$0xff]
        %v445 = vld [vmem:[#allocation2 + $0xe0] sm:$0xff]
        %v446 = vld [vmem:[#allocation2 + $0xe8] sm:$0xff]
        %v447 = vld [vmem:[#allocation2 + $0xf0] sm:$0xff]
        %v448 = vld [vmem:[#allocation2 + $0xf8] sm:$0xff]
        %v449 = vld [vmem:[#allocation2 + $0x100] sm:$0xff]
        %v450 = vld [vmem:[#allocation2 + $0x108] sm:$0xff]
        %v451 = vld [vmem:[#allocation2 + $0x110] sm:$0xff]
        %v452 = vld [vmem:[#allocation2 + $0x118] sm:$0xff]
        %v453 = vld [vmem:[#allocation2 + $0x120] sm:$0xff]
        %v454 = vld [vmem:[#allocation2 + $0x128] sm:$0xff]
        %v455 = vld [vmem:[#allocation2 + $0x130] sm:$0xff]
        %v456 = vld [vmem:[#allocation2 + $0x138] sm:$0xff]
        %v457 = vld [vmem:[#allocation2 + $0x140] sm:$0xff]
        %v458 = vld [vmem:[#allocation2 + $0x148] sm:$0xff]
        %v459 = vld [vmem:[#allocation2 + $0x150] sm:$0xff]
        %v460 = vld [vmem:[#allocation2 + $0x158] sm:$0xff]
        %v461 = vld [vmem:[#allocation2 + $0x160] sm:$0xff]
        %v462 = vld [vmem:[#allocation2 + $0x168] sm:$0xff]
        %v463 = vld [vmem:[#allocation2 + $0x170] sm:$0xff]
        %v464 = vld [vmem:[#allocation2 + $0x178] sm:$0xff]
        %v465 = vld [vmem:[#allocation2 + $0x180] sm:$0xff]
        %v466 = vld [vmem:[#allocation2 + $0x188] sm:$0xff]
        %v467 = vld [vmem:[#allocation2 + $0x190] sm:$0xff]
        %v468 = vld [vmem:[#allocation2 + $0x198] sm:$0xff]
        %v469 = vld [vmem:[#allocation2 + $0x1a0] sm:$0xff]
        %v470 = vld [vmem:[#allocation2 + $0x1a8] sm:$0xff]
        %v471 = vld [vmem:[#allocation2 + $0x1b0] sm:$0xff]
        %v472 = vld [vmem:[#allocation2 + $0x1b8] sm:$0xff]
        %v473 = vld [vmem:[#allocation2 + $0x1c0] sm:$0xff]
        %v474 = vld [vmem:[#allocation2 + $0x1c8] sm:$0xff]
        %v475 = vld [vmem:[#allocation2 + $0x1d0] sm:$0xff]
        %v476 = vld [vmem:[#allocation2 + $0x1d8] sm:$0xff]
        %v477 = vld [vmem:[#allocation2 + $0x1e0] sm:$0xff]
        %v478 = vld [vmem:[#allocation2 + $0x1e8] sm:$0xff]
        %v479 = vld [vmem:[#allocation2 + $0x1f0] sm:$0xff]
        %v480 = vld [vmem:[#allocation2 + $0x1f8] sm:$0xff]
        %v481 = vld [vmem:[#allocation2 + $0x200] sm:$0xff]
        %v482 = vld [vmem:[#allocation2 + $0x208] sm:$0xff]
        %v483 = vld [vmem:[#allocation2 + $0x210] sm:$0xff]
        %v484 = vld [vmem:[#allocation2 + $0x218] sm:$0xff]
        %v485 = vld [vmem:[#allocation2 + $0x220] sm:$0xff]
        %v486 = vld [vmem:[#allocation2 + $0x228] sm:$0xff]
        %v487 = vld [vmem:[#allocation2 + $0x230] sm:$0xff]
        %v488 = vld [vmem:[#allocation2 + $0x238] sm:$0xff]
        %v489 = vld [vmem:[#allocation2 + $0x240] sm:$0xff]
        %v490 = vld [vmem:[#allocation2 + $0x248] sm:$0xff]
        %v491 = vld [vmem:[#allocation2 + $0x250] sm:$0xff]
        %v492 = vld [vmem:[#allocation2 + $0x258] sm:$0xff]
        %v493 = vld [vmem:[#allocation2 + $0x260] sm:$0xff]
        %v494 = vld [vmem:[#allocation2 + $0x268] sm:$0xff]
        %v495 = vld [vmem:[#allocation2 + $0x270] sm:$0xff]
        %v496 = vld [vmem:[#allocation2 + $0x278] sm:$0xff]
        %v497 = vld [vmem:[#allocation2 + $0x280] sm:$0xff]
        %v498 = vld [vmem:[#allocation2 + $0x288] sm:$0xff]
        %v499 = vld [vmem:[#allocation2 + $0x290] sm:$0xff]
        %v500 = vld [vmem:[#allocation2 + $0x298] sm:$0xff]
        %v501 = vld [vmem:[#allocation2 + $0x2a0] sm:$0xff]
        %v502 = vld [vmem:[#allocation2 + $0x2a8] sm:$0xff]
        %v503 = vld [vmem:[#allocation2 + $0x2b0] sm:$0xff]
        %v504 = vld [vmem:[#allocation2 + $0x2b8] sm:$0xff]
        %v505 = vld [vmem:[#allocation2 + $0x2c0] sm:$0xff]
        %v506 = vld [vmem:[#allocation2 + $0x2c8] sm:$0xff]
        %v507 = vld [vmem:[#allocation2 + $0x2d0] sm:$0xff]
        %v508 = vld [vmem:[#allocation2 + $0x2d8] sm:$0xff]
        %v509 = vld [vmem:[#allocation2 + $0x2e0] sm:$0xff]
        %v510 = vld [vmem:[#allocation2 + $0x2e8] sm:$0xff]
        %v511 = vld [vmem:[#allocation2 + $0x2f0] sm:$0xff]
        %v512 = vld [vmem:[#allocation2 + $0x2f8] sm:$0xff]
        %v513 = vld [vmem:[#allocation2 + $0x300] sm:$0xff]
        %v514 = vld [vmem:[#allocation2 + $0x308] sm:$0xff]
        %v515 = vld [vmem:[#allocation2 + $0x310] sm:$0xff]
        %v516 = vld [vmem:[#allocation2 + $0x318] sm:$0xff]
        %v517 = vld [vmem:[#allocation2 + $0x320] sm:$0xff]
        %v518 = vld [vmem:[#allocation2 + $0x328] sm:$0xff]
        %v519 = vld [vmem:[#allocation2 + $0x330] sm:$0xff]
        %v520 = vld [vmem:[#allocation2 + $0x338] sm:$0xff]
        %v521 = vld [vmem:[#allocation2 + $0x340] sm:$0xff]
        %v522 = vld [vmem:[#allocation2 + $0x348] sm:$0xff]
        %v523 = vld [vmem:[#allocation2 + $0x350] sm:$0xff]
        %v524 = vld [vmem:[#allocation2 + $0x358] sm:$0xff]
        %v525 = vld [vmem:[#allocation2 + $0x360] sm:$0xff]
        %v526 = vld [vmem:[#allocation2 + $0x368] sm:$0xff]
        %v527 = vld [vmem:[#allocation2 + $0x370] sm:$0xff]
        %v528 = vld [vmem:[#allocation2 + $0x378] sm:$0xff]
        %v529 = vld [vmem:[#allocation2 + $0x380] sm:$0xff]
        %v530 = vld [vmem:[#allocation2 + $0x388] sm:$0xff]
        %v531 = vld [vmem:[#allocation2 + $0x390] sm:$0xff]
        %v532 = vld [vmem:[#allocation2 + $0x398] sm:$0xff]
        %v533 = vld [vmem:[#allocation2 + $0x3a0] sm:$0xff]
        %v534 = vld [vmem:[#allocation2 + $0x3a8] sm:$0xff]
        %v535 = vld [vmem:[#allocation2 + $0x3b0] sm:$0xff]
        %v536 = vld [vmem:[#allocation2 + $0x3b8] sm:$0xff]
        %v537 = vld [vmem:[#allocation2 + $0x3c0] sm:$0xff]
        %v538 = vld [vmem:[#allocation2 + $0x3c8] sm:$0xff]
        %v539 = vld [vmem:[#allocation2 + $0x3d0] sm:$0xff]
        %v540 = vld [vmem:[#allocation2 + $0x3d8] sm:$0xff]
        %v541 = vld [vmem:[#allocation2 + $0x3e0] sm:$0xff]
        %v542 = vld [vmem:[#allocation2 + $0x3e8] sm:$0xff]
        %v543 = vld [vmem:[#allocation2 + $0x3f0] sm:$0xff]
        %v544 = vld [vmem:[#allocation2 + $0x3f8] sm:$0xff]
        %v545 = vld [vmem:[#allocation3] sm:$0xff]
        %v546 = vld [vmem:[#allocation3 + $0x8] sm:$0xff]
        %v547 = vld [vmem:[#allocation3 + $0x10] sm:$0xff]
        %v548 = vld [vmem:[#allocation3 + $0x18] sm:$0xff]
        %v549 = vld [vmem:[#allocation3 + $0x20] sm:$0xff]
        %v550 = vld [vmem:[#allocation3 + $0x28] sm:$0xff]
        %v551 = vld [vmem:[#allocation3 + $0x30] sm:$0xff]
        %v552 = vld [vmem:[#allocation3 + $0x38] sm:$0xff]
        %v553 = vld [vmem:[#allocation3 + $0x40] sm:$0xff]
        %v554 = vld [vmem:[#allocation3 + $0x48] sm:$0xff]
        %v555 = vld [vmem:[#allocation3 + $0x50] sm:$0xff]
        %v556 = vld [vmem:[#allocation3 + $0x58] sm:$0xff]
        %v557 = vld [vmem:[#allocation3 + $0x60] sm:$0xff]
        %v558 = vld [vmem:[#allocation3 + $0x68] sm:$0xff]
        %v559 = vld [vmem:[#allocation3 + $0x70] sm:$0xff]
        %v560 = vld [vmem:[#allocation3 + $0x78] sm:$0xff]
        %v561 = vld [vmem:[#allocation3 + $0x80] sm:$0xff]
        %v562 = vld [vmem:[#allocation3 + $0x88] sm:$0xff]
        %v563 = vld [vmem:[#allocation3 + $0x90] sm:$0xff]
        %v564 = vld [vmem:[#allocation3 + $0x98] sm:$0xff]
        %v565 = vld [vmem:[#allocation3 + $0xa0] sm:$0xff]
        %v566 = vld [vmem:[#allocation3 + $0xa8] sm:$0xff]
        %v567 = vld [vmem:[#allocation3 + $0xb0] sm:$0xff]
        %v568 = vld [vmem:[#allocation3 + $0xb8] sm:$0xff]
        %v569 = vld [vmem:[#allocation3 + $0xc0] sm:$0xff]
        %v570 = vld [vmem:[#allocation3 + $0xc8] sm:$0xff]
        %v571 = vld [vmem:[#allocation3 + $0xd0] sm:$0xff]
        %v572 = vld [vmem:[#allocation3 + $0xd8] sm:$0xff]
        %v573 = vld [vmem:[#allocation3 + $0xe0] sm:$0xff]
        %v574 = vld [vmem:[#allocation3 + $0xe8] sm:$0xff]
        %v575 = vld [vmem:[#allocation3 + $0xf0] sm:$0xff]
        %v576 = vld [vmem:[#allocation3 + $0xf8] sm:$0xff]
        %v577 = vld [vmem:[#allocation3 + $0x100] sm:$0xff]
        %v578 = vld [vmem:[#allocation3 + $0x108] sm:$0xff]
        %v579 = vld [vmem:[#allocation3 + $0x110] sm:$0xff]
        %v580 = vld [vmem:[#allocation3 + $0x118] sm:$0xff]
        %v581 = vld [vmem:[#allocation3 + $0x120] sm:$0xff]
        %v582 = vld [vmem:[#allocation3 + $0x128] sm:$0xff]
        %v583 = vld [vmem:[#allocation3 + $0x130] sm:$0xff]
        %v584 = vld [vmem:[#allocation3 + $0x138] sm:$0xff]
        %v585 = vld [vmem:[#allocation3 + $0x140] sm:$0xff]
        %v586 = vld [vmem:[#allocation3 + $0x148] sm:$0xff]
        %v587 = vld [vmem:[#allocation3 + $0x150] sm:$0xff]
        %v588 = vld [vmem:[#allocation3 + $0x158] sm:$0xff]
        %v589 = vld [vmem:[#allocation3 + $0x160] sm:$0xff]
        %v590 = vld [vmem:[#allocation3 + $0x168] sm:$0xff]
        %v591 = vld [vmem:[#allocation3 + $0x170] sm:$0xff]
        %v592 = vld [vmem:[#allocation3 + $0x178] sm:$0xff]
        %v593 = vld [vmem:[#allocation3 + $0x180] sm:$0xff]
        %v594 = vld [vmem:[#allocation3 + $0x188] sm:$0xff]
        %v595 = vld [vmem:[#allocation3 + $0x190] sm:$0xff]
        %v596 = vld [vmem:[#allocation3 + $0x198] sm:$0xff]
        %v597 = vld [vmem:[#allocation3 + $0x1a0] sm:$0xff]
        %v598 = vld [vmem:[#allocation3 + $0x1a8] sm:$0xff]
        %v599 = vld [vmem:[#allocation3 + $0x1b0] sm:$0xff]
        %v600 = vld [vmem:[#allocation3 + $0x1b8] sm:$0xff]
        %v601 = vld [vmem:[#allocation3 + $0x1c0] sm:$0xff]
        %v602 = vld [vmem:[#allocation3 + $0x1c8] sm:$0xff]
        %v603 = vld [vmem:[#allocation3 + $0x1d0] sm:$0xff]
        %v604 = vld [vmem:[#allocation3 + $0x1d8] sm:$0xff]
        %v605 = vld [vmem:[#allocation3 + $0x1e0] sm:$0xff]
        %v606 = vld [vmem:[#allocation3 + $0x1e8] sm:$0xff]
        %v607 = vld [vmem:[#allocation3 + $0x1f0] sm:$0xff]
        %v608 = vld [vmem:[#allocation3 + $0x1f8] sm:$0xff]
        %v609 = vld [vmem:[#allocation3 + $0x200] sm:$0xff]
        %v610 = vld [vmem:[#allocation3 + $0x208] sm:$0xff]
        %v611 = vld [vmem:[#allocation3 + $0x210] sm:$0xff]
        %v612 = vld [vmem:[#allocation3 + $0x218] sm:$0xff]
        %v613 = vld [vmem:[#allocation3 + $0x220] sm:$0xff]
        %v614 = vld [vmem:[#allocation3 + $0x228] sm:$0xff]
        %v615 = vld [vmem:[#allocation3 + $0x230] sm:$0xff]
        %v616 = vld [vmem:[#allocation3 + $0x238] sm:$0xff]
        %v617 = vld [vmem:[#allocation3 + $0x240] sm:$0xff]
        %v618 = vld [vmem:[#allocation3 + $0x248] sm:$0xff]
        %v619 = vld [vmem:[#allocation3 + $0x250] sm:$0xff]
        %v620 = vld [vmem:[#allocation3 + $0x258] sm:$0xff]
        %v621 = vld [vmem:[#allocation3 + $0x260] sm:$0xff]
        %v622 = vld [vmem:[#allocation3 + $0x268] sm:$0xff]
        %v623 = vld [vmem:[#allocation3 + $0x270] sm:$0xff]
        %v624 = vld [vmem:[#allocation3 + $0x278] sm:$0xff]
        %v625 = vld [vmem:[#allocation3 + $0x280] sm:$0xff]
        %v626 = vld [vmem:[#allocation3 + $0x288] sm:$0xff]
        %v627 = vld [vmem:[#allocation3 + $0x290] sm:$0xff]
        %v628 = vld [vmem:[#allocation3 + $0x298] sm:$0xff]
        %v629 = vld [vmem:[#allocation3 + $0x2a0] sm:$0xff]
        %v630 = vld [vmem:[#allocation3 + $0x2a8] sm:$0xff]
        %v631 = vld [vmem:[#allocation3 + $0x2b0] sm:$0xff]
        %v632 = vld [vmem:[#allocation3 + $0x2b8] sm:$0xff]
        %v633 = vld [vmem:[#allocation3 + $0x2c0] sm:$0xff]
        %v634 = vld [vmem:[#allocation3 + $0x2c8] sm:$0xff]
        %v635 = vld [vmem:[#allocation3 + $0x2d0] sm:$0xff]
        %v636 = vld [vmem:[#allocation3 + $0x2d8] sm:$0xff]
        %v637 = vld [vmem:[#allocation3 + $0x2e0] sm:$0xff]
        %v638 = vld [vmem:[#allocation3 + $0x2e8] sm:$0xff]
        %v639 = vld [vmem:[#allocation3 + $0x2f0] sm:$0xff]
        %v640 = vld [vmem:[#allocation3 + $0x2f8] sm:$0xff]
        %v641 = vld [vmem:[#allocation3 + $0x300] sm:$0xff]
        %v642 = vld [vmem:[#allocation3 + $0x308] sm:$0xff]
        %v643 = vld [vmem:[#allocation3 + $0x310] sm:$0xff]
        %v644 = vld [vmem:[#allocation3 + $0x318] sm:$0xff]
        %v645 = vld [vmem:[#allocation3 + $0x320] sm:$0xff]
        %v646 = vld [vmem:[#allocation3 + $0x328] sm:$0xff]
        %v647 = vld [vmem:[#allocation3 + $0x330] sm:$0xff]
        %v648 = vld [vmem:[#allocation3 + $0x338] sm:$0xff]
        %v649 = vld [vmem:[#allocation3 + $0x340] sm:$0xff]
        %v650 = vld [vmem:[#allocation3 + $0x348] sm:$0xff]
        %v651 = vld [vmem:[#allocation3 + $0x350] sm:$0xff]
        %v652 = vld [vmem:[#allocation3 + $0x358] sm:$0xff]
        %v653 = vld [vmem:[#allocation3 + $0x360] sm:$0xff]
        %v654 = vld [vmem:[#allocation3 + $0x368] sm:$0xff]
        %v655 = vld [vmem:[#allocation3 + $0x370] sm:$0xff]
        %v656 = vld [vmem:[#allocation3 + $0x378] sm:$0xff]
        %v657 = vld [vmem:[#allocation3 + $0x380] sm:$0xff]
        %v658 = vld [vmem:[#allocation3 + $0x388] sm:$0xff]
        %v659 = vld [vmem:[#allocation3 + $0x390] sm:$0xff]
        %v660 = vld [vmem:[#allocation3 + $0x398] sm:$0xff]
        %v661 = vld [vmem:[#allocation3 + $0x3a0] sm:$0xff]
        %v662 = vld [vmem:[#allocation3 + $0x3a8] sm:$0xff]
        %v663 = vld [vmem:[#allocation3 + $0x3b0] sm:$0xff]
        %v664 = vld [vmem:[#allocation3 + $0x3b8] sm:$0xff]
        %v665 = vld [vmem:[#allocation3 + $0x3c0] sm:$0xff]
        %v666 = vld [vmem:[#allocation3 + $0x3c8] sm:$0xff]
        %v667 = vld [vmem:[#allocation3 + $0x3d0] sm:$0xff]
        %v668 = vld [vmem:[#allocation3 + $0x3d8] sm:$0xff]
        %v669 = vld [vmem:[#allocation3 + $0x3e0] sm:$0xff]
        %v670 = vld [vmem:[#allocation3 + $0x3e8] sm:$0xff]
        %v671 = vld [vmem:[#allocation3 + $0x3f0] sm:$0xff]
        %v672 = vld [vmem:[#allocation3 + $0x3f8] sm:$0xff]
        %v673 = vpack.c.bf16 %v547, %v545
        %v674 = vpack.c.bf16 %v548, %v546
        %v675 = vpack.c.bf16 %v551, %v549
        %v676 = vpack.c.bf16 %v552, %v550
        %v677 = vpack.c.bf16 %v555, %v553
        %v678 = vpack.c.bf16 %v556, %v554
        %v679 = vpack.c.bf16 %v559, %v557
        %v680 = vpack.c.bf16 %v560, %v558
        %v681 = vpack.c.bf16 %v563, %v561
        %v682 = vpack.c.bf16 %v564, %v562
        %v683 = vpack.c.bf16 %v567, %v565
        %v684 = vpack.c.bf16 %v568, %v566
        %v685 = vpack.c.bf16 %v571, %v569
        %v686 = vpack.c.bf16 %v572, %v570
        %v687 = vpack.c.bf16 %v575, %v573
        %v688 = vpack.c.bf16 %v576, %v574
        %v689 = vpack.c.bf16 %v579, %v577
        %v690 = vpack.c.bf16 %v580, %v578
        %v691 = vpack.c.bf16 %v583, %v581
        %v692 = vpack.c.bf16 %v584, %v582
        %v693 = vpack.c.bf16 %v587, %v585
        %v694 = vpack.c.bf16 %v588, %v586
        %v695 = vpack.c.bf16 %v591, %v589
        %v696 = vpack.c.bf16 %v592, %v590
        %v697 = vpack.c.bf16 %v595, %v593
        %v698 = vpack.c.bf16 %v596, %v594
        %v699 = vpack.c.bf16 %v599, %v597
        %v700 = vpack.c.bf16 %v600, %v598
        %v701 = vpack.c.bf16 %v603, %v601
        %v702 = vpack.c.bf16 %v604, %v602
        %v703 = vpack.c.bf16 %v607, %v605
        %v704 = vpack.c.bf16 %v608, %v606
        %v705 = vpack.c.bf16 %v611, %v609
        %v706 = vpack.c.bf16 %v612, %v610
        %v707 = vpack.c.bf16 %v615, %v613
        %v708 = vpack.c.bf16 %v616, %v614
        %v709 = vpack.c.bf16 %v619, %v617
        %v710 = vpack.c.bf16 %v620, %v618
        %v711 = vpack.c.bf16 %v623, %v621
        %v712 = vpack.c.bf16 %v624, %v622
        %v713 = vpack.c.bf16 %v627, %v625
        %v714 = vpack.c.bf16 %v628, %v626
        %v715 = vpack.c.bf16 %v631, %v629
        %v716 = vpack.c.bf16 %v632, %v630
        %v717 = vpack.c.bf16 %v635, %v633
        %v718 = vpack.c.bf16 %v636, %v634
        %v719 = vpack.c.bf16 %v639, %v637
        %v720 = vpack.c.bf16 %v640, %v638
        %v721 = vpack.c.bf16 %v643, %v641
        %v722 = vpack.c.bf16 %v644, %v642
        %v723 = vpack.c.bf16 %v647, %v645
        %v724 = vpack.c.bf16 %v648, %v646
        %v725 = vpack.c.bf16 %v651, %v649
        %v726 = vpack.c.bf16 %v652, %v650
        %v727 = vpack.c.bf16 %v655, %v653
        %v728 = vpack.c.bf16 %v656, %v654
        %v729 = vpack.c.bf16 %v659, %v657
        %v730 = vpack.c.bf16 %v660, %v658
        %v731 = vpack.c.bf16 %v663, %v661
        %v732 = vpack.c.bf16 %v664, %v662
        %v733 = vpack.c.bf16 %v667, %v665
        %v734 = vpack.c.bf16 %v668, %v666
        %v735 = vpack.c.bf16 %v671, %v669
        %v736 = vpack.c.bf16 %v672, %v670
        %v737 = vld [vmem:[%s241] sm:$0xff]
        %v738 = vld [vmem:[%s241 + $0x8] sm:$0xff]
        %v739 = vld [vmem:[%s241 + $0x10] sm:$0xff]
        %v740 = vld [vmem:[%s241 + $0x18] sm:$0xff]
        %v741 = vld [vmem:[%s241 + $0x20] sm:$0xff]
        %v742 = vld [vmem:[%s241 + $0x28] sm:$0xff]
        %v743 = vld [vmem:[%s241 + $0x30] sm:$0xff]
        %v744 = vld [vmem:[%s241 + $0x38] sm:$0xff]
        %v745 = vld [vmem:[%s241 + $0x40] sm:$0xff]
        %v746 = vld [vmem:[%s241 + $0x48] sm:$0xff]
        %v747 = vld [vmem:[%s241 + $0x50] sm:$0xff]
        %v748 = vld [vmem:[%s241 + $0x58] sm:$0xff]
        %v749 = vld [vmem:[%s241 + $0x60] sm:$0xff]
        %v750 = vld [vmem:[%s241 + $0x68] sm:$0xff]
        %v751 = vld [vmem:[%s241 + $0x70] sm:$0xff]
        %v752 = vld [vmem:[%s241 + $0x78] sm:$0xff]
        %v753 = vld [vmem:[%s241 + $0x80] sm:$0xff]
        %v754 = vld [vmem:[%s241 + $0x88] sm:$0xff]
        %v755 = vld [vmem:[%s241 + $0x90] sm:$0xff]
        %v756 = vld [vmem:[%s241 + $0x98] sm:$0xff]
        %v757 = vld [vmem:[%s241 + $0xa0] sm:$0xff]
        %v758 = vld [vmem:[%s241 + $0xa8] sm:$0xff]
        %v759 = vld [vmem:[%s241 + $0xb0] sm:$0xff]
        %v760 = vld [vmem:[%s241 + $0xb8] sm:$0xff]
        %v761 = vld [vmem:[%s241 + $0xc0] sm:$0xff]
        %v762 = vld [vmem:[%s241 + $0xc8] sm:$0xff]
        %v763 = vld [vmem:[%s241 + $0xd0] sm:$0xff]
        %v764 = vld [vmem:[%s241 + $0xd8] sm:$0xff]
        %v765 = vld [vmem:[%s241 + $0xe0] sm:$0xff]
        %v766 = vld [vmem:[%s241 + $0xe8] sm:$0xff]
        %v767 = vld [vmem:[%s241 + $0xf0] sm:$0xff]
        %v768 = vld [vmem:[%s241 + $0xf8] sm:$0xff]
        %v769 = vld [vmem:[%s241 + $0x100] sm:$0xff]
        %v770 = vld [vmem:[%s241 + $0x108] sm:$0xff]
        %v771 = vld [vmem:[%s241 + $0x110] sm:$0xff]
        %v772 = vld [vmem:[%s241 + $0x118] sm:$0xff]
        %v773 = vld [vmem:[%s241 + $0x120] sm:$0xff]
        %v774 = vld [vmem:[%s241 + $0x128] sm:$0xff]
        %v775 = vld [vmem:[%s241 + $0x130] sm:$0xff]
        %v776 = vld [vmem:[%s241 + $0x138] sm:$0xff]
        %v777 = vld [vmem:[%s241 + $0x140] sm:$0xff]
        %v778 = vld [vmem:[%s241 + $0x148] sm:$0xff]
        %v779 = vld [vmem:[%s241 + $0x150] sm:$0xff]
        %v780 = vld [vmem:[%s241 + $0x158] sm:$0xff]
        %v781 = vld [vmem:[%s241 + $0x160] sm:$0xff]
        %v782 = vld [vmem:[%s241 + $0x168] sm:$0xff]
        %v783 = vld [vmem:[%s241 + $0x170] sm:$0xff]
        %v784 = vld [vmem:[%s241 + $0x178] sm:$0xff]
        %v785 = vld [vmem:[%s241 + $0x180] sm:$0xff]
        %v786 = vld [vmem:[%s241 + $0x188] sm:$0xff]
        %v787 = vld [vmem:[%s241 + $0x190] sm:$0xff]
        %v788 = vld [vmem:[%s241 + $0x198] sm:$0xff]
        %v789 = vld [vmem:[%s241 + $0x1a0] sm:$0xff]
        %v790 = vld [vmem:[%s241 + $0x1a8] sm:$0xff]
        %v791 = vld [vmem:[%s241 + $0x1b0] sm:$0xff]
        %v792 = vld [vmem:[%s241 + $0x1b8] sm:$0xff]
        %v793 = vld [vmem:[%s241 + $0x1c0] sm:$0xff]
        %v794 = vld [vmem:[%s241 + $0x1c8] sm:$0xff]
        %v795 = vld [vmem:[%s241 + $0x1d0] sm:$0xff]
        %v796 = vld [vmem:[%s241 + $0x1d8] sm:$0xff]
        %v797 = vld [vmem:[%s241 + $0x1e0] sm:$0xff]
        %v798 = vld [vmem:[%s241 + $0x1e8] sm:$0xff]
        %v799 = vld [vmem:[%s241 + $0x1f0] sm:$0xff]
        %v800 = vld [vmem:[%s241 + $0x1f8] sm:$0xff]
        %v801 = vpack.c.bf16 %v739, %v737
        %v802 = vpack.c.bf16 %v740, %v738
        %v803 = vpack.c.bf16 %v743, %v741
        %v804 = vpack.c.bf16 %v744, %v742
        %v805 = vpack.c.bf16 %v747, %v745
        %v806 = vpack.c.bf16 %v748, %v746
        %v807 = vpack.c.bf16 %v751, %v749
        %v808 = vpack.c.bf16 %v752, %v750
        %v809 = vpack.c.bf16 %v755, %v753
        %v810 = vpack.c.bf16 %v756, %v754
        %v811 = vpack.c.bf16 %v759, %v757
        %v812 = vpack.c.bf16 %v760, %v758
        %v813 = vpack.c.bf16 %v763, %v761
        %v814 = vpack.c.bf16 %v764, %v762
        %v815 = vpack.c.bf16 %v767, %v765
        %v816 = vpack.c.bf16 %v768, %v766
        %v817 = vpack.c.bf16 %v771, %v769
        %v818 = vpack.c.bf16 %v772, %v770
        %v819 = vpack.c.bf16 %v775, %v773
        %v820 = vpack.c.bf16 %v776, %v774
        %v821 = vpack.c.bf16 %v779, %v777
        %v822 = vpack.c.bf16 %v780, %v778
        %v823 = vpack.c.bf16 %v783, %v781
        %v824 = vpack.c.bf16 %v784, %v782
        %v825 = vpack.c.bf16 %v787, %v785
        %v826 = vpack.c.bf16 %v788, %v786
        %v827 = vpack.c.bf16 %v791, %v789
        %v828 = vpack.c.bf16 %v792, %v790
        %v829 = vpack.c.bf16 %v795, %v793
        %v830 = vpack.c.bf16 %v796, %v794
        %v831 = vpack.c.bf16 %v799, %v797
        %v832 = vpack.c.bf16 %v800, %v798
        %833 = vmatprep.subr.bf16.mxu0 %v802
        %834 = vmatpush1.bf16.msra.mxu0 %v801
        %835 = vmatprep.subr.bf16.mxu0 %v804
        %836 = vmatpush1.bf16.msra.mxu0 %v803
        %837 = vmatprep.subr.bf16.mxu0 %v806
        %838 = vmatpush1.bf16.msra.mxu0 %v805
        %839 = vmatprep.subr.bf16.mxu0 %v808
        %840 = vmatpush1.bf16.msra.mxu0 %v807
        %841 = vmatprep.subr.bf16.mxu0 %v810
        %842 = vmatpush1.bf16.msra.mxu0 %v809
        %843 = vmatprep.subr.bf16.mxu0 %v812
        %844 = vmatpush1.bf16.msra.mxu0 %v811
        %845 = vmatprep.subr.bf16.mxu0 %v814
        %846 = vmatpush1.bf16.msra.mxu0 %v813
        %847 = vmatprep.subr.bf16.mxu0 %v816
        %848 = vmatpush1.bf16.msra.mxu0 %v815
        %849 = vmatprep.subr.bf16.mxu0 %v818
        %850 = vmatpush1.bf16.msra.mxu0 %v817
        %851 = vmatprep.subr.bf16.mxu0 %v820
        %852 = vmatpush1.bf16.msra.mxu0 %v819
        %853 = vmatprep.subr.bf16.mxu0 %v822
        %854 = vmatpush1.bf16.msra.mxu0 %v821
        %855 = vmatprep.subr.bf16.mxu0 %v824
        %856 = vmatpush1.bf16.msra.mxu0 %v823
        %857 = vmatprep.subr.bf16.mxu0 %v826
        %858 = vmatpush1.bf16.msra.mxu0 %v825
        %859 = vmatprep.subr.bf16.mxu0 %v828
        %860 = vmatpush1.bf16.msra.mxu0 %v827
        %861 = vmatprep.subr.bf16.mxu0 %v830
        %862 = vmatpush1.bf16.msra.mxu0 %v829
        %863 = vmatprep.subr.bf16.mxu0 %v832
        %864 = vmatpush1.bf16.msra.mxu0 %v831
        %865 = vmatprep.mubr.bf16.mxu0 %v674
        %866 = vmatmul.mubr.bf16.gmra.mrb[0].mxu0 %v673
        %v867 = vpop.f32.mrb[0].mxu0
        %v868 = vadd.f32 0.0, %v867
        %v869 = vpop.f32.mrb[0].mxu0
        %v870 = vadd.f32 0.0, %v869
        %v871 = vpop.f32.mrb[0].mxu0
        %v872 = vadd.f32 0.0, %v871
        %v873 = vpop.f32.mrb[0].mxu0
        %v874 = vadd.f32 0.0, %v873
        %875 = vmatprep.mubr.bf16.mxu0 %v676
        %876 = vmatmul.mubr.bf16.gmra.mrb[0].mxu0 %v675
        %v877 = vpop.f32.mrb[0].mxu0
        %v878 = vadd.f32 0.0, %v877
        %v879 = vpop.f32.mrb[0].mxu0
        %v880 = vadd.f32 0.0, %v879
        %v881 = vpop.f32.mrb[0].mxu0
        %v882 = vadd.f32 0.0, %v881
        %v883 = vpop.f32.mrb[0].mxu0
        %v884 = vadd.f32 0.0, %v883
        %885 = vmatprep.mubr.bf16.mxu0 %v678
        %886 = vmatmul.mubr.bf16.gmra.mrb[0].mxu0 %v677
        %v887 = vpop.f32.mrb[0].mxu0
        %v888 = vadd.f32 0.0, %v887
        %v889 = vpop.f32.mrb[0].mxu0
        %v890 = vadd.f32 0.0, %v889
        %v891 = vpop.f32.mrb[0].mxu0
        %v892 = vadd.f32 0.0, %v891
        %v893 = vpop.f32.mrb[0].mxu0
        %v894 = vadd.f32 0.0, %v893
        %895 = vmatprep.mubr.bf16.mxu0 %v680
        %896 = vmatmul.mubr.bf16.gmra.mrb[0].mxu0 %v679
        %v897 = vpop.f32.mrb[0].mxu0
        %v898 = vadd.f32 0.0, %v897
        %v899 = vpop.f32.mrb[0].mxu0
        %v900 = vadd.f32 0.0, %v899
        %v901 = vpop.f32.mrb[0].mxu0
        %v902 = vadd.f32 0.0, %v901
        %v903 = vpop.f32.mrb[0].mxu0
        %v904 = vadd.f32 0.0, %v903
        %905 = vmatprep.mubr.bf16.mxu0 %v682
        %906 = vmatmul.mubr.bf16.gmra.mrb[0].mxu0 %v681
        %v907 = vpop.f32.mrb[0].mxu0
        %v908 = vadd.f32 0.0, %v907
        %v909 = vpop.f32.mrb[0].mxu0
        %v910 = vadd.f32 0.0, %v909
        %v911 = vpop.f32.mrb[0].mxu0
        %v912 = vadd.f32 0.0, %v911
        %v913 = vpop.f32.mrb[0].mxu0
        %v914 = vadd.f32 0.0, %v913
        %915 = vmatprep.mubr.bf16.mxu0 %v684
        %916 = vmatmul.mubr.bf16.gmra.mrb[0].mxu0 %v683
        %v917 = vpop.f32.mrb[0].mxu0
        %v918 = vadd.f32 0.0, %v917
        %v919 = vpop.f32.mrb[0].mxu0
        %v920 = vadd.f32 0.0, %v919
        %v921 = vpop.f32.mrb[0].mxu0
        %v922 = vadd.f32 0.0, %v921
        %v923 = vpop.f32.mrb[0].mxu0
        %v924 = vadd.f32 0.0, %v923
        %925 = vmatprep.mubr.bf16.mxu0 %v686
        %926 = vmatmul.mubr.bf16.gmra.mrb[0].mxu0 %v685
        %v927 = vpop.f32.mrb[0].mxu0
        %v928 = vadd.f32 0.0, %v927
        %v929 = vpop.f32.mrb[0].mxu0
        %v930 = vadd.f32 0.0, %v929
        %v931 = vpop.f32.mrb[0].mxu0
        %v932 = vadd.f32 0.0, %v931
        %v933 = vpop.f32.mrb[0].mxu0
        %v934 = vadd.f32 0.0, %v933
        %935 = vmatprep.mubr.bf16.mxu0 %v688
        %936 = vmatmul.mubr.bf16.gmra.mrb[0].mxu0 %v687
        %v937 = vpop.f32.mrb[0].mxu0
        %v938 = vadd.f32 0.0, %v937
        %v939 = vpop.f32.mrb[0].mxu0
        %v940 = vadd.f32 0.0, %v939
        %v941 = vpop.f32.mrb[0].mxu0
        %v942 = vadd.f32 0.0, %v941
        %v943 = vpop.f32.mrb[0].mxu0
        %v944 = vadd.f32 0.0, %v943
        %945 = vmatprep.mubr.bf16.mxu0 %v690
        %946 = vmatmul.mubr.bf16.gmra.mrb[0].mxu0 %v689
        %v947 = vpop.f32.mrb[0].mxu0
        %v948 = vadd.f32 0.0, %v947
        %v949 = vpop.f32.mrb[0].mxu0
        %v950 = vadd.f32 0.0, %v949
        %v951 = vpop.f32.mrb[0].mxu0
        %v952 = vadd.f32 0.0, %v951
        %v953 = vpop.f32.mrb[0].mxu0
        %v954 = vadd.f32 0.0, %v953
        %955 = vmatprep.mubr.bf16.mxu0 %v692
        %956 = vmatmul.mubr.bf16.gmra.mrb[0].mxu0 %v691
        %v957 = vpop.f32.mrb[0].mxu0
        %v958 = vadd.f32 0.0, %v957
        %v959 = vpop.f32.mrb[0].mxu0
        %v960 = vadd.f32 0.0, %v959
        %v961 = vpop.f32.mrb[0].mxu0
        %v962 = vadd.f32 0.0, %v961
        %v963 = vpop.f32.mrb[0].mxu0
        %v964 = vadd.f32 0.0, %v963
        %965 = vmatprep.mubr.bf16.mxu0 %v694
        %966 = vmatmul.mubr.bf16.gmra.mrb[0].mxu0 %v693
        %v967 = vpop.f32.mrb[0].mxu0
        %v968 = vadd.f32 0.0, %v967
        %v969 = vpop.f32.mrb[0].mxu0
        %v970 = vadd.f32 0.0, %v969
        %v971 = vpop.f32.mrb[0].mxu0
        %v972 = vadd.f32 0.0, %v971
        %v973 = vpop.f32.mrb[0].mxu0
        %v974 = vadd.f32 0.0, %v973
        %975 = vmatprep.mubr.bf16.mxu0 %v696
        %976 = vmatmul.mubr.bf16.gmra.mrb[0].mxu0 %v695
        %v977 = vpop.f32.mrb[0].mxu0
        %v978 = vadd.f32 0.0, %v977
        %v979 = vpop.f32.mrb[0].mxu0
        %v980 = vadd.f32 0.0, %v979
        %v981 = vpop.f32.mrb[0].mxu0
        %v982 = vadd.f32 0.0, %v981
        %v983 = vpop.f32.mrb[0].mxu0
        %v984 = vadd.f32 0.0, %v983
        %985 = vmatprep.mubr.bf16.mxu0 %v698
        %986 = vmatmul.mubr.bf16.gmra.mrb[0].mxu0 %v697
        %v987 = vpop.f32.mrb[0].mxu0
        %v988 = vadd.f32 0.0, %v987
        %v989 = vpop.f32.mrb[0].mxu0
        %v990 = vadd.f32 0.0, %v989
        %v991 = vpop.f32.mrb[0].mxu0
        %v992 = vadd.f32 0.0, %v991
        %v993 = vpop.f32.mrb[0].mxu0
        %v994 = vadd.f32 0.0, %v993
        %995 = vmatprep.mubr.bf16.mxu0 %v700
        %996 = vmatmul.mubr.bf16.gmra.mrb[0].mxu0 %v699
        %v997 = vpop.f32.mrb[0].mxu0
        %v998 = vadd.f32 0.0, %v997
        %v999 = vpop.f32.mrb[0].mxu0
        %v1000 = vadd.f32 0.0, %v999
        %v1001 = vpop.f32.mrb[0].mxu0
        %v1002 = vadd.f32 0.0, %v1001
        %v1003 = vpop.f32.mrb[0].mxu0
        %v1004 = vadd.f32 0.0, %v1003
        %1005 = vmatprep.mubr.bf16.mxu0 %v702
        %1006 = vmatmul.mubr.bf16.gmra.mrb[0].mxu0 %v701
        %v1007 = vpop.f32.mrb[0].mxu0
        %v1008 = vadd.f32 0.0, %v1007
        %v1009 = vpop.f32.mrb[0].mxu0
        %v1010 = vadd.f32 0.0, %v1009
        %v1011 = vpop.f32.mrb[0].mxu0
        %v1012 = vadd.f32 0.0, %v1011
        %v1013 = vpop.f32.mrb[0].mxu0
        %v1014 = vadd.f32 0.0, %v1013
        %1015 = vmatprep.mubr.bf16.mxu0 %v704
        %1016 = vmatmul.mubr.bf16.gmra.mrb[0].mxu0 %v703
        %v1017 = vpop.f32.mrb[0].mxu0
        %v1018 = vadd.f32 0.0, %v1017
        %v1019 = vpop.f32.mrb[0].mxu0
        %v1020 = vadd.f32 0.0, %v1019
        %v1021 = vpop.f32.mrb[0].mxu0
        %v1022 = vadd.f32 0.0, %v1021
        %v1023 = vpop.f32.mrb[0].mxu0
        %v1024 = vadd.f32 0.0, %v1023
        %1025 = vmatprep.mubr.bf16.mxu0 %v706
        %1026 = vmatmul.mubr.bf16.gmra.mrb[0].mxu0 %v705
        %v1027 = vpop.f32.mrb[0].mxu0
        %v1028 = vadd.f32 0.0, %v1027
        %v1029 = vpop.f32.mrb[0].mxu0
        %v1030 = vadd.f32 0.0, %v1029
        %v1031 = vpop.f32.mrb[0].mxu0
        %v1032 = vadd.f32 0.0, %v1031
        %v1033 = vpop.f32.mrb[0].mxu0
        %v1034 = vadd.f32 0.0, %v1033
        %1035 = vmatprep.mubr.bf16.mxu0 %v708
        %1036 = vmatmul.mubr.bf16.gmra.mrb[0].mxu0 %v707
        %v1037 = vpop.f32.mrb[0].mxu0
        %v1038 = vadd.f32 0.0, %v1037
        %v1039 = vpop.f32.mrb[0].mxu0
        %v1040 = vadd.f32 0.0, %v1039
        %v1041 = vpop.f32.mrb[0].mxu0
        %v1042 = vadd.f32 0.0, %v1041
        %v1043 = vpop.f32.mrb[0].mxu0
        %v1044 = vadd.f32 0.0, %v1043
        %1045 = vmatprep.mubr.bf16.mxu0 %v710
        %1046 = vmatmul.mubr.bf16.gmra.mrb[0].mxu0 %v709
        %v1047 = vpop.f32.mrb[0].mxu0
        %v1048 = vadd.f32 0.0, %v1047
        %v1049 = vpop.f32.mrb[0].mxu0
        %v1050 = vadd.f32 0.0, %v1049
        %v1051 = vpop.f32.mrb[0].mxu0
        %v1052 = vadd.f32 0.0, %v1051
        %v1053 = vpop.f32.mrb[0].mxu0
        %v1054 = vadd.f32 0.0, %v1053
        %1055 = vmatprep.mubr.bf16.mxu0 %v712
        %1056 = vmatmul.mubr.bf16.gmra.mrb[0].mxu0 %v711
        %v1057 = vpop.f32.mrb[0].mxu0
        %v1058 = vadd.f32 0.0, %v1057
        %v1059 = vpop.f32.mrb[0].mxu0
        %v1060 = vadd.f32 0.0, %v1059
        %v1061 = vpop.f32.mrb[0].mxu0
        %v1062 = vadd.f32 0.0, %v1061
        %v1063 = vpop.f32.mrb[0].mxu0
        %v1064 = vadd.f32 0.0, %v1063
        %1065 = vmatprep.mubr.bf16.mxu0 %v714
        %1066 = vmatmul.mubr.bf16.gmra.mrb[0].mxu0 %v713
        %v1067 = vpop.f32.mrb[0].mxu0
        %v1068 = vadd.f32 0.0, %v1067
        %v1069 = vpop.f32.mrb[0].mxu0
        %v1070 = vadd.f32 0.0, %v1069
        %v1071 = vpop.f32.mrb[0].mxu0
        %v1072 = vadd.f32 0.0, %v1071
        %v1073 = vpop.f32.mrb[0].mxu0
        %v1074 = vadd.f32 0.0, %v1073
        %1075 = vmatprep.mubr.bf16.mxu0 %v716
        %1076 = vmatmul.mubr.bf16.gmra.mrb[0].mxu0 %v715
        %v1077 = vpop.f32.mrb[0].mxu0
        %v1078 = vadd.f32 0.0, %v1077
        %v1079 = vpop.f32.mrb[0].mxu0
        %v1080 = vadd.f32 0.0, %v1079
        %v1081 = vpop.f32.mrb[0].mxu0
        %v1082 = vadd.f32 0.0, %v1081
        %v1083 = vpop.f32.mrb[0].mxu0
        %v1084 = vadd.f32 0.0, %v1083
        %1085 = vmatprep.mubr.bf16.mxu0 %v718
        %1086 = vmatmul.mubr.bf16.gmra.mrb[0].mxu0 %v717
        %v1087 = vpop.f32.mrb[0].mxu0
        %v1088 = vadd.f32 0.0, %v1087
        %v1089 = vpop.f32.mrb[0].mxu0
        %v1090 = vadd.f32 0.0, %v1089
        %v1091 = vpop.f32.mrb[0].mxu0
        %v1092 = vadd.f32 0.0, %v1091
        %v1093 = vpop.f32.mrb[0].mxu0
        %v1094 = vadd.f32 0.0, %v1093
        %1095 = vmatprep.mubr.bf16.mxu0 %v720
        %1096 = vmatmul.mubr.bf16.gmra.mrb[0].mxu0 %v719
        %v1097 = vpop.f32.mrb[0].mxu0
        %v1098 = vadd.f32 0.0, %v1097
        %v1099 = vpop.f32.mrb[0].mxu0
        %v1100 = vadd.f32 0.0, %v1099
        %v1101 = vpop.f32.mrb[0].mxu0
        %v1102 = vadd.f32 0.0, %v1101
        %v1103 = vpop.f32.mrb[0].mxu0
        %v1104 = vadd.f32 0.0, %v1103
        %1105 = vmatprep.mubr.bf16.mxu0 %v722
        %1106 = vmatmul.mubr.bf16.gmra.mrb[0].mxu0 %v721
        %v1107 = vpop.f32.mrb[0].mxu0
        %v1108 = vadd.f32 0.0, %v1107
        %v1109 = vpop.f32.mrb[0].mxu0
        %v1110 = vadd.f32 0.0, %v1109
        %v1111 = vpop.f32.mrb[0].mxu0
        %v1112 = vadd.f32 0.0, %v1111
        %v1113 = vpop.f32.mrb[0].mxu0
        %v1114 = vadd.f32 0.0, %v1113
        %1115 = vmatprep.mubr.bf16.mxu0 %v724
        %1116 = vmatmul.mubr.bf16.gmra.mrb[0].mxu0 %v723
        %v1117 = vpop.f32.mrb[0].mxu0
        %v1118 = vadd.f32 0.0, %v1117
        %v1119 = vpop.f32.mrb[0].mxu0
        %v1120 = vadd.f32 0.0, %v1119
        %v1121 = vpop.f32.mrb[0].mxu0
        %v1122 = vadd.f32 0.0, %v1121
        %v1123 = vpop.f32.mrb[0].mxu0
        %v1124 = vadd.f32 0.0, %v1123
        %1125 = vmatprep.mubr.bf16.mxu0 %v726
        %1126 = vmatmul.mubr.bf16.gmra.mrb[0].mxu0 %v725
        %v1127 = vpop.f32.mrb[0].mxu0
        %v1128 = vadd.f32 0.0, %v1127
        %v1129 = vpop.f32.mrb[0].mxu0
        %v1130 = vadd.f32 0.0, %v1129
        %v1131 = vpop.f32.mrb[0].mxu0
        %v1132 = vadd.f32 0.0, %v1131
        %v1133 = vpop.f32.mrb[0].mxu0
        %v1134 = vadd.f32 0.0, %v1133
        %1135 = vmatprep.mubr.bf16.mxu0 %v728
        %1136 = vmatmul.mubr.bf16.gmra.mrb[0].mxu0 %v727
        %v1137 = vpop.f32.mrb[0].mxu0
        %v1138 = vadd.f32 0.0, %v1137
        %v1139 = vpop.f32.mrb[0].mxu0
        %v1140 = vadd.f32 0.0, %v1139
        %v1141 = vpop.f32.mrb[0].mxu0
        %v1142 = vadd.f32 0.0, %v1141
        %v1143 = vpop.f32.mrb[0].mxu0
        %v1144 = vadd.f32 0.0, %v1143
        %1145 = vmatprep.mubr.bf16.mxu0 %v730
        %1146 = vmatmul.mubr.bf16.gmra.mrb[0].mxu0 %v729
        %v1147 = vpop.f32.mrb[0].mxu0
        %v1148 = vadd.f32 0.0, %v1147
        %v1149 = vpop.f32.mrb[0].mxu0
        %v1150 = vadd.f32 0.0, %v1149
        %v1151 = vpop.f32.mrb[0].mxu0
        %v1152 = vadd.f32 0.0, %v1151
        %v1153 = vpop.f32.mrb[0].mxu0
        %v1154 = vadd.f32 0.0, %v1153
        %1155 = vmatprep.mubr.bf16.mxu0 %v732
        %1156 = vmatmul.mubr.bf16.gmra.mrb[0].mxu0 %v731
        %v1157 = vpop.f32.mrb[0].mxu0
        %v1158 = vadd.f32 0.0, %v1157
        %v1159 = vpop.f32.mrb[0].mxu0
        %v1160 = vadd.f32 0.0, %v1159
        %v1161 = vpop.f32.mrb[0].mxu0
        %v1162 = vadd.f32 0.0, %v1161
        %v1163 = vpop.f32.mrb[0].mxu0
        %v1164 = vadd.f32 0.0, %v1163
        %1165 = vmatprep.mubr.bf16.mxu0 %v734
        %1166 = vmatmul.mubr.bf16.gmra.mrb[0].mxu0 %v733
        %v1167 = vpop.f32.mrb[0].mxu0
        %v1168 = vadd.f32 0.0, %v1167
        %v1169 = vpop.f32.mrb[0].mxu0
        %v1170 = vadd.f32 0.0, %v1169
        %v1171 = vpop.f32.mrb[0].mxu0
        %v1172 = vadd.f32 0.0, %v1171
        %v1173 = vpop.f32.mrb[0].mxu0
        %v1174 = vadd.f32 0.0, %v1173
        %1175 = vmatprep.mubr.bf16.mxu0 %v736
        %1176 = vmatmul.mubr.bf16.gmra.mrb[0].mxu0 %v735
        %v1177 = vpop.f32.mrb[0].mxu0
        %v1178 = vadd.f32 0.0, %v1177
        %v1179 = vpop.f32.mrb[0].mxu0
        %v1180 = vadd.f32 0.0, %v1179
        %v1181 = vpop.f32.mrb[0].mxu0
        %v1182 = vadd.f32 0.0, %v1181
        %v1183 = vpop.f32.mrb[0].mxu0
        %v1184 = vadd.f32 0.0, %v1183
        %1185 = vdwg.mxu0
        %v1186 = vadd.f32 %v417, %v868
        %v1187 = vadd.f32 %v418, %v870
        %v1188 = vadd.f32 %v419, %v872
        %v1189 = vadd.f32 %v420, %v874
        %v1190 = vadd.f32 %v421, %v878
        %v1191 = vadd.f32 %v422, %v880
        %v1192 = vadd.f32 %v423, %v882
        %v1193 = vadd.f32 %v424, %v884
        %v1194 = vadd.f32 %v425, %v888
        %v1195 = vadd.f32 %v426, %v890
        %v1196 = vadd.f32 %v427, %v892
        %v1197 = vadd.f32 %v428, %v894
        %v1198 = vadd.f32 %v429, %v898
        %v1199 = vadd.f32 %v430, %v900
        %v1200 = vadd.f32 %v431, %v902
        %v1201 = vadd.f32 %v432, %v904
        %v1202 = vadd.f32 %v433, %v908
        %v1203 = vadd.f32 %v434, %v910
        %v1204 = vadd.f32 %v435, %v912
        %v1205 = vadd.f32 %v436, %v914
        %v1206 = vadd.f32 %v437, %v918
        %v1207 = vadd.f32 %v438, %v920
        %v1208 = vadd.f32 %v439, %v922
        %v1209 = vadd.f32 %v440, %v924
        %v1210 = vadd.f32 %v441, %v928
        %v1211 = vadd.f32 %v442, %v930
        %v1212 = vadd.f32 %v443, %v932
        %v1213 = vadd.f32 %v444, %v934
        %v1214 = vadd.f32 %v445, %v938
        %v1215 = vadd.f32 %v446, %v940
        %v1216 = vadd.f32 %v447, %v942
        %v1217 = vadd.f32 %v448, %v944
        %v1218 = vadd.f32 %v449, %v948
        %v1219 = vadd.f32 %v450, %v950
        %v1220 = vadd.f32 %v451, %v952
        %v1221 = vadd.f32 %v452, %v954
        %v1222 = vadd.f32 %v453, %v958
        %v1223 = vadd.f32 %v454, %v960
        %v1224 = vadd.f32 %v455, %v962
        %v1225 = vadd.f32 %v456, %v964
        %v1226 = vadd.f32 %v457, %v968
        %v1227 = vadd.f32 %v458, %v970
        %v1228 = vadd.f32 %v459, %v972
        %v1229 = vadd.f32 %v460, %v974
        %v1230 = vadd.f32 %v461, %v978
        %v1231 = vadd.f32 %v462, %v980
        %v1232 = vadd.f32 %v463, %v982
        %v1233 = vadd.f32 %v464, %v984
        %v1234 = vadd.f32 %v465, %v988
        %v1235 = vadd.f32 %v466, %v990
        %v1236 = vadd.f32 %v467, %v992
        %v1237 = vadd.f32 %v468, %v994
        %v1238 = vadd.f32 %v469, %v998
        %v1239 = vadd.f32 %v470, %v1000
        %v1240 = vadd.f32 %v471, %v1002
        %v1241 = vadd.f32 %v472, %v1004
        %v1242 = vadd.f32 %v473, %v1008
        %v1243 = vadd.f32 %v474, %v1010
        %v1244 = vadd.f32 %v475, %v1012
        %v1245 = vadd.f32 %v476, %v1014
        %v1246 = vadd.f32 %v477, %v1018
        %v1247 = vadd.f32 %v478, %v1020
        %v1248 = vadd.f32 %v479, %v1022
        %v1249 = vadd.f32 %v480, %v1024
        %v1250 = vadd.f32 %v481, %v1028
        %v1251 = vadd.f32 %v482, %v1030
        %v1252 = vadd.f32 %v483, %v1032
        %v1253 = vadd.f32 %v484, %v1034
        %v1254 = vadd.f32 %v485, %v1038
        %v1255 = vadd.f32 %v486, %v1040
        %v1256 = vadd.f32 %v487, %v1042
        %v1257 = vadd.f32 %v488, %v1044
        %v1258 = vadd.f32 %v489, %v1048
        %v1259 = vadd.f32 %v490, %v1050
        %v1260 = vadd.f32 %v491, %v1052
        %v1261 = vadd.f32 %v492, %v1054
        %v1262 = vadd.f32 %v493, %v1058
        %v1263 = vadd.f32 %v494, %v1060
        %v1264 = vadd.f32 %v495, %v1062
        %v1265 = vadd.f32 %v496, %v1064
        %v1266 = vadd.f32 %v497, %v1068
        %v1267 = vadd.f32 %v498, %v1070
        %v1268 = vadd.f32 %v499, %v1072
        %v1269 = vadd.f32 %v500, %v1074
        %v1270 = vadd.f32 %v501, %v1078
        %v1271 = vadd.f32 %v502, %v1080
        %v1272 = vadd.f32 %v503, %v1082
        %v1273 = vadd.f32 %v504, %v1084
        %v1274 = vadd.f32 %v505, %v1088
        %v1275 = vadd.f32 %v506, %v1090
        %v1276 = vadd.f32 %v507, %v1092
        %v1277 = vadd.f32 %v508, %v1094
        %v1278 = vadd.f32 %v509, %v1098
        %v1279 = vadd.f32 %v510, %v1100
        %v1280 = vadd.f32 %v511, %v1102
        %v1281 = vadd.f32 %v512, %v1104
        %v1282 = vadd.f32 %v513, %v1108
        %v1283 = vadd.f32 %v514, %v1110
        %v1284 = vadd.f32 %v515, %v1112
        %v1285 = vadd.f32 %v516, %v1114
        %v1286 = vadd.f32 %v517, %v1118
        %v1287 = vadd.f32 %v518, %v1120
        %v1288 = vadd.f32 %v519, %v1122
        %v1289 = vadd.f32 %v520, %v1124
        %v1290 = vadd.f32 %v521, %v1128
        %v1291 = vadd.f32 %v522, %v1130
        %v1292 = vadd.f32 %v523, %v1132
        %v1293 = vadd.f32 %v524, %v1134
        %v1294 = vadd.f32 %v525, %v1138
        %v1295 = vadd.f32 %v526, %v1140
        %v1296 = vadd.f32 %v527, %v1142
        %v1297 = vadd.f32 %v528, %v1144
        %v1298 = vadd.f32 %v529, %v1148
        %v1299 = vadd.f32 %v530, %v1150
        %v1300 = vadd.f32 %v531, %v1152
        %v1301 = vadd.f32 %v532, %v1154
        %v1302 = vadd.f32 %v533, %v1158
        %v1303 = vadd.f32 %v534, %v1160
        %v1304 = vadd.f32 %v535, %v1162
        %v1305 = vadd.f32 %v536, %v1164
        %v1306 = vadd.f32 %v537, %v1168
        %v1307 = vadd.f32 %v538, %v1170
        %v1308 = vadd.f32 %v539, %v1172
        %v1309 = vadd.f32 %v540, %v1174
        %v1310 = vadd.f32 %v541, %v1178
        %v1311 = vadd.f32 %v542, %v1180
        %v1312 = vadd.f32 %v543, %v1182
        %v1313 = vadd.f32 %v544, %v1184
        %1314 = vst [vmem:[#allocation2] sm:$0xff] %v1186
        %1315 = vst [vmem:[#allocation2 + $0x8] sm:$0xff] %v1187
        %1316 = vst [vmem:[#allocation2 + $0x10] sm:$0xff] %v1188
        %1317 = vst [vmem:[#allocation2 + $0x18] sm:$0xff] %v1189
        %1318 = vst [vmem:[#allocation2 + $0x20] sm:$0xff] %v1190
        %1319 = vst [vmem:[#allocation2 + $0x28] sm:$0xff] %v1191
        %1320 = vst [vmem:[#allocation2 + $0x30] sm:$0xff] %v1192
        %1321 = vst [vmem:[#allocation2 + $0x38] sm:$0xff] %v1193
        %1322 = vst [vmem:[#allocation2 + $0x40] sm:$0xff] %v1194
        %1323 = vst [vmem:[#allocation2 + $0x48] sm:$0xff] %v1195
        %1324 = vst [vmem:[#allocation2 + $0x50] sm:$0xff] %v1196
        %1325 = vst [vmem:[#allocation2 + $0x58] sm:$0xff] %v1197
        %1326 = vst [vmem:[#allocation2 + $0x60] sm:$0xff] %v1198
        %1327 = vst [vmem:[#allocation2 + $0x68] sm:$0xff] %v1199
        %1328 = vst [vmem:[#allocation2 + $0x70] sm:$0xff] %v1200
        %1329 = vst [vmem:[#allocation2 + $0x78] sm:$0xff] %v1201
        %1330 = vst [vmem:[#allocation2 + $0x80] sm:$0xff] %v1202
        %1331 = vst [vmem:[#allocation2 + $0x88] sm:$0xff] %v1203
        %1332 = vst [vmem:[#allocation2 + $0x90] sm:$0xff] %v1204
        %1333 = vst [vmem:[#allocation2 + $0x98] sm:$0xff] %v1205
        %1334 = vst [vmem:[#allocation2 + $0xa0] sm:$0xff] %v1206
        %1335 = vst [vmem:[#allocation2 + $0xa8] sm:$0xff] %v1207
        %1336 = vst [vmem:[#allocation2 + $0xb0] sm:$0xff] %v1208
        %1337 = vst [vmem:[#allocation2 + $0xb8] sm:$0xff] %v1209
        %1338 = vst [vmem:[#allocation2 + $0xc0] sm:$0xff] %v1210
        %1339 = vst [vmem:[#allocation2 + $0xc8] sm:$0xff] %v1211
        %1340 = vst [vmem:[#allocation2 + $0xd0] sm:$0xff] %v1212
        %1341 = vst [vmem:[#allocation2 + $0xd8] sm:$0xff] %v1213
        %1342 = vst [vmem:[#allocation2 + $0xe0] sm:$0xff] %v1214
        %1343 = vst [vmem:[#allocation2 + $0xe8] sm:$0xff] %v1215
        %1344 = vst [vmem:[#allocation2 + $0xf0] sm:$0xff] %v1216
        %1345 = vst [vmem:[#allocation2 + $0xf8] sm:$0xff] %v1217
        %1346 = vst [vmem:[#allocation2 + $0x100] sm:$0xff] %v1218
        %1347 = vst [vmem:[#allocation2 + $0x108] sm:$0xff] %v1219
        %1348 = vst [vmem:[#allocation2 + $0x110] sm:$0xff] %v1220
        %1349 = vst [vmem:[#allocation2 + $0x118] sm:$0xff] %v1221
        %1350 = vst [vmem:[#allocation2 + $0x120] sm:$0xff] %v1222
        %1351 = vst [vmem:[#allocation2 + $0x128] sm:$0xff] %v1223
        %1352 = vst [vmem:[#allocation2 + $0x130] sm:$0xff] %v1224
        %1353 = vst [vmem:[#allocation2 + $0x138] sm:$0xff] %v1225
        %1354 = vst [vmem:[#allocation2 + $0x140] sm:$0xff] %v1226
        %1355 = vst [vmem:[#allocation2 + $0x148] sm:$0xff] %v1227
        %1356 = vst [vmem:[#allocation2 + $0x150] sm:$0xff] %v1228
        %1357 = vst [vmem:[#allocation2 + $0x158] sm:$0xff] %v1229
        %1358 = vst [vmem:[#allocation2 + $0x160] sm:$0xff] %v1230
        %1359 = vst [vmem:[#allocation2 + $0x168] sm:$0xff] %v1231
        %1360 = vst [vmem:[#allocation2 + $0x170] sm:$0xff] %v1232
        %1361 = vst [vmem:[#allocation2 + $0x178] sm:$0xff] %v1233
        %1362 = vst [vmem:[#allocation2 + $0x180] sm:$0xff] %v1234
        %1363 = vst [vmem:[#allocation2 + $0x188] sm:$0xff] %v1235
        %1364 = vst [vmem:[#allocation2 + $0x190] sm:$0xff] %v1236
        %1365 = vst [vmem:[#allocation2 + $0x198] sm:$0xff] %v1237
        %1366 = vst [vmem:[#allocation2 + $0x1a0] sm:$0xff] %v1238
        %1367 = vst [vmem:[#allocation2 + $0x1a8] sm:$0xff] %v1239
        %1368 = vst [vmem:[#allocation2 + $0x1b0] sm:$0xff] %v1240
        %1369 = vst [vmem:[#allocation2 + $0x1b8] sm:$0xff] %v1241
        %1370 = vst [vmem:[#allocation2 + $0x1c0] sm:$0xff] %v1242
        %1371 = vst [vmem:[#allocation2 + $0x1c8] sm:$0xff] %v1243
        %1372 = vst [vmem:[#allocation2 + $0x1d0] sm:$0xff] %v1244
        %1373 = vst [vmem:[#allocation2 + $0x1d8] sm:$0xff] %v1245
        %1374 = vst [vmem:[#allocation2 + $0x1e0] sm:$0xff] %v1246
        %1375 = vst [vmem:[#allocation2 + $0x1e8] sm:$0xff] %v1247
        %1376 = vst [vmem:[#allocation2 + $0x1f0] sm:$0xff] %v1248
        %1377 = vst [vmem:[#allocation2 + $0x1f8] sm:$0xff] %v1249
        %1378 = vst [vmem:[#allocation2 + $0x200] sm:$0xff] %v1250
        %1379 = vst [vmem:[#allocation2 + $0x208] sm:$0xff] %v1251
        %1380 = vst [vmem:[#allocation2 + $0x210] sm:$0xff] %v1252
        %1381 = vst [vmem:[#allocation2 + $0x218] sm:$0xff] %v1253
        %1382 = vst [vmem:[#allocation2 + $0x220] sm:$0xff] %v1254
        %1383 = vst [vmem:[#allocation2 + $0x228] sm:$0xff] %v1255
        %1384 = vst [vmem:[#allocation2 + $0x230] sm:$0xff] %v1256
        %1385 = vst [vmem:[#allocation2 + $0x238] sm:$0xff] %v1257
        %1386 = vst [vmem:[#allocation2 + $0x240] sm:$0xff] %v1258
        %1387 = vst [vmem:[#allocation2 + $0x248] sm:$0xff] %v1259
        %1388 = vst [vmem:[#allocation2 + $0x250] sm:$0xff] %v1260
        %1389 = vst [vmem:[#allocation2 + $0x258] sm:$0xff] %v1261
        %1390 = vst [vmem:[#allocation2 + $0x260] sm:$0xff] %v1262
        %1391 = vst [vmem:[#allocation2 + $0x268] sm:$0xff] %v1263
        %1392 = vst [vmem:[#allocation2 + $0x270] sm:$0xff] %v1264
        %1393 = vst [vmem:[#allocation2 + $0x278] sm:$0xff] %v1265
        %1394 = vst [vmem:[#allocation2 + $0x280] sm:$0xff] %v1266
        %1395 = vst [vmem:[#allocation2 + $0x288] sm:$0xff] %v1267
        %1396 = vst [vmem:[#allocation2 + $0x290] sm:$0xff] %v1268
        %1397 = vst [vmem:[#allocation2 + $0x298] sm:$0xff] %v1269
        %1398 = vst [vmem:[#allocation2 + $0x2a0] sm:$0xff] %v1270
        %1399 = vst [vmem:[#allocation2 + $0x2a8] sm:$0xff] %v1271
        %1400 = vst [vmem:[#allocation2 + $0x2b0] sm:$0xff] %v1272
        %1401 = vst [vmem:[#allocation2 + $0x2b8] sm:$0xff] %v1273
        %1402 = vst [vmem:[#allocation2 + $0x2c0] sm:$0xff] %v1274
        %1403 = vst [vmem:[#allocation2 + $0x2c8] sm:$0xff] %v1275
        %1404 = vst [vmem:[#allocation2 + $0x2d0] sm:$0xff] %v1276
        %1405 = vst [vmem:[#allocation2 + $0x2d8] sm:$0xff] %v1277
        %1406 = vst [vmem:[#allocation2 + $0x2e0] sm:$0xff] %v1278
        %1407 = vst [vmem:[#allocation2 + $0x2e8] sm:$0xff] %v1279
        %1408 = vst [vmem:[#allocation2 + $0x2f0] sm:$0xff] %v1280
        %1409 = vst [vmem:[#allocation2 + $0x2f8] sm:$0xff] %v1281
        %1410 = vst [vmem:[#allocation2 + $0x300] sm:$0xff] %v1282
        %1411 = vst [vmem:[#allocation2 + $0x308] sm:$0xff] %v1283
        %1412 = vst [vmem:[#allocation2 + $0x310] sm:$0xff] %v1284
        %1413 = vst [vmem:[#allocation2 + $0x318] sm:$0xff] %v1285
        %1414 = vst [vmem:[#allocation2 + $0x320] sm:$0xff] %v1286
        %1415 = vst [vmem:[#allocation2 + $0x328] sm:$0xff] %v1287
        %1416 = vst [vmem:[#allocation2 + $0x330] sm:$0xff] %v1288
        %1417 = vst [vmem:[#allocation2 + $0x338] sm:$0xff] %v1289
        %1418 = vst [vmem:[#allocation2 + $0x340] sm:$0xff] %v1290
        %1419 = vst [vmem:[#allocation2 + $0x348] sm:$0xff] %v1291
        %1420 = vst [vmem:[#allocation2 + $0x350] sm:$0xff] %v1292
        %1421 = vst [vmem:[#allocation2 + $0x358] sm:$0xff] %v1293
        %1422 = vst [vmem:[#allocation2 + $0x360] sm:$0xff] %v1294
        %1423 = vst [vmem:[#allocation2 + $0x368] sm:$0xff] %v1295
        %1424 = vst [vmem:[#allocation2 + $0x370] sm:$0xff] %v1296
        %1425 = vst [vmem:[#allocation2 + $0x378] sm:$0xff] %v1297
        %1426 = vst [vmem:[#allocation2 + $0x380] sm:$0xff] %v1298
        %1427 = vst [vmem:[#allocation2 + $0x388] sm:$0xff] %v1299
        %1428 = vst [vmem:[#allocation2 + $0x390] sm:$0xff] %v1300
        %1429 = vst [vmem:[#allocation2 + $0x398] sm:$0xff] %v1301
        %1430 = vst [vmem:[#allocation2 + $0x3a0] sm:$0xff] %v1302
        %1431 = vst [vmem:[#allocation2 + $0x3a8] sm:$0xff] %v1303
        %1432 = vst [vmem:[#allocation2 + $0x3b0] sm:$0xff] %v1304
        %1433 = vst [vmem:[#allocation2 + $0x3b8] sm:$0xff] %v1305
        %1434 = vst [vmem:[#allocation2 + $0x3c0] sm:$0xff] %v1306
        %1435 = vst [vmem:[#allocation2 + $0x3c8] sm:$0xff] %v1307
        %1436 = vst [vmem:[#allocation2 + $0x3d0] sm:$0xff] %v1308
        %1437 = vst [vmem:[#allocation2 + $0x3d8] sm:$0xff] %v1309
        %1438 = vst [vmem:[#allocation2 + $0x3e0] sm:$0xff] %v1310
        %1439 = vst [vmem:[#allocation2 + $0x3e8] sm:$0xff] %v1311
        %1440 = vst [vmem:[#allocation2 + $0x3f0] sm:$0xff] %v1312
        %1441 = vst [vmem:[#allocation2 + $0x3f8] sm:$0xff] %v1313
        // Predicated region
        $region49: #{tpu_custom_call.1} parent=31 // pred_check
          %p1442 = pneg %p285
        $region50: #{tpu_custom_call.1} parent=31 // pred_check_branch
          %1444 = sbr.rel (%p1442) target = $region52
        $region51: #{tpu_custom_call.1} parent=31 // pred_region
          %v1445 = vld [vmem:[#allocation2] sm:$0xff]
          %v1446 = vld [vmem:[#allocation2 + $0x8] sm:$0xff]
          %v1447 = vld [vmem:[#allocation2 + $0x10] sm:$0xff]
          %v1448 = vld [vmem:[#allocation2 + $0x18] sm:$0xff]
          %v1449 = vld [vmem:[#allocation2 + $0x20] sm:$0xff]
          %v1450 = vld [vmem:[#allocation2 + $0x28] sm:$0xff]
          %v1451 = vld [vmem:[#allocation2 + $0x30] sm:$0xff]
          %v1452 = vld [vmem:[#allocation2 + $0x38] sm:$0xff]
          %v1453 = vld [vmem:[#allocation2 + $0x40] sm:$0xff]
          %v1454 = vld [vmem:[#allocation2 + $0x48] sm:$0xff]
          %v1455 = vld [vmem:[#allocation2 + $0x50] sm:$0xff]
          %v1456 = vld [vmem:[#allocation2 + $0x58] sm:$0xff]
          %v1457 = vld [vmem:[#allocation2 + $0x60] sm:$0xff]
          %v1458 = vld [vmem:[#allocation2 + $0x68] sm:$0xff]
          %v1459 = vld [vmem:[#allocation2 + $0x70] sm:$0xff]
          %v1460 = vld [vmem:[#allocation2 + $0x78] sm:$0xff]
          %v1461 = vld [vmem:[#allocation2 + $0x80] sm:$0xff]
          %v1462 = vld [vmem:[#allocation2 + $0x88] sm:$0xff]
          %v1463 = vld [vmem:[#allocation2 + $0x90] sm:$0xff]
          %v1464 = vld [vmem:[#allocation2 + $0x98] sm:$0xff]
          %v1465 = vld [vmem:[#allocation2 + $0xa0] sm:$0xff]
          %v1466 = vld [vmem:[#allocation2 + $0xa8] sm:$0xff]
          %v1467 = vld [vmem:[#allocation2 + $0xb0] sm:$0xff]
          %v1468 = vld [vmem:[#allocation2 + $0xb8] sm:$0xff]
          %v1469 = vld [vmem:[#allocation2 + $0xc0] sm:$0xff]
          %v1470 = vld [vmem:[#allocation2 + $0xc8] sm:$0xff]
          %v1471 = vld [vmem:[#allocation2 + $0xd0] sm:$0xff]
          %v1472 = vld [vmem:[#allocation2 + $0xd8] sm:$0xff]
          %v1473 = vld [vmem:[#allocation2 + $0xe0] sm:$0xff]
          %v1474 = vld [vmem:[#allocation2 + $0xe8] sm:$0xff]
          %v1475 = vld [vmem:[#allocation2 + $0xf0] sm:$0xff]
          %v1476 = vld [vmem:[#allocation2 + $0xf8] sm:$0xff]
          %v1477 = vld [vmem:[#allocation2 + $0x100] sm:$0xff]
          %v1478 = vld [vmem:[#allocation2 + $0x108] sm:$0xff]
          %v1479 = vld [vmem:[#allocation2 + $0x110] sm:$0xff]
          %v1480 = vld [vmem:[#allocation2 + $0x118] sm:$0xff]
          %v1481 = vld [vmem:[#allocation2 + $0x120] sm:$0xff]
          %v1482 = vld [vmem:[#allocation2 + $0x128] sm:$0xff]
          %v1483 = vld [vmem:[#allocation2 + $0x130] sm:$0xff]
          %v1484 = vld [vmem:[#allocation2 + $0x138] sm:$0xff]
          %v1485 = vld [vmem:[#allocation2 + $0x140] sm:$0xff]
          %v1486 = vld [vmem:[#allocation2 + $0x148] sm:$0xff]
          %v1487 = vld [vmem:[#allocation2 + $0x150] sm:$0xff]
          %v1488 = vld [vmem:[#allocation2 + $0x158] sm:$0xff]
          %v1489 = vld [vmem:[#allocation2 + $0x160] sm:$0xff]
          %v1490 = vld [vmem:[#allocation2 + $0x168] sm:$0xff]
          %v1491 = vld [vmem:[#allocation2 + $0x170] sm:$0xff]
          %v1492 = vld [vmem:[#allocation2 + $0x178] sm:$0xff]
          %v1493 = vld [vmem:[#allocation2 + $0x180] sm:$0xff]
          %v1494 = vld [vmem:[#allocation2 + $0x188] sm:$0xff]
          %v1495 = vld [vmem:[#allocation2 + $0x190] sm:$0xff]
          %v1496 = vld [vmem:[#allocation2 + $0x198] sm:$0xff]
          %v1497 = vld [vmem:[#allocation2 + $0x1a0] sm:$0xff]
          %v1498 = vld [vmem:[#allocation2 + $0x1a8] sm:$0xff]
          %v1499 = vld [vmem:[#allocation2 + $0x1b0] sm:$0xff]
          %v1500 = vld [vmem:[#allocation2 + $0x1b8] sm:$0xff]
          %v1501 = vld [vmem:[#allocation2 + $0x1c0] sm:$0xff]
          %v1502 = vld [vmem:[#allocation2 + $0x1c8] sm:$0xff]
          %v1503 = vld [vmem:[#allocation2 + $0x1d0] sm:$0xff]
          %v1504 = vld [vmem:[#allocation2 + $0x1d8] sm:$0xff]
          %v1505 = vld [vmem:[#allocation2 + $0x1e0] sm:$0xff]
          %v1506 = vld [vmem:[#allocation2 + $0x1e8] sm:$0xff]
          %v1507 = vld [vmem:[#allocation2 + $0x1f0] sm:$0xff]
          %v1508 = vld [vmem:[#allocation2 + $0x1f8] sm:$0xff]
          %v1509 = vld [vmem:[#allocation2 + $0x200] sm:$0xff]
          %v1510 = vld [vmem:[#allocation2 + $0x208] sm:$0xff]
          %v1511 = vld [vmem:[#allocation2 + $0x210] sm:$0xff]
          %v1512 = vld [vmem:[#allocation2 + $0x218] sm:$0xff]
          %v1513 = vld [vmem:[#allocation2 + $0x220] sm:$0xff]
          %v1514 = vld [vmem:[#allocation2 + $0x228] sm:$0xff]
          %v1515 = vld [vmem:[#allocation2 + $0x230] sm:$0xff]
          %v1516 = vld [vmem:[#allocation2 + $0x238] sm:$0xff]
          %v1517 = vld [vmem:[#allocation2 + $0x240] sm:$0xff]
          %v1518 = vld [vmem:[#allocation2 + $0x248] sm:$0xff]
          %v1519 = vld [vmem:[#allocation2 + $0x250] sm:$0xff]
          %v1520 = vld [vmem:[#allocation2 + $0x258] sm:$0xff]
          %v1521 = vld [vmem:[#allocation2 + $0x260] sm:$0xff]
          %v1522 = vld [vmem:[#allocation2 + $0x268] sm:$0xff]
          %v1523 = vld [vmem:[#allocation2 + $0x270] sm:$0xff]
          %v1524 = vld [vmem:[#allocation2 + $0x278] sm:$0xff]
          %v1525 = vld [vmem:[#allocation2 + $0x280] sm:$0xff]
          %v1526 = vld [vmem:[#allocation2 + $0x288] sm:$0xff]
          %v1527 = vld [vmem:[#allocation2 + $0x290] sm:$0xff]
          %v1528 = vld [vmem:[#allocation2 + $0x298] sm:$0xff]
          %v1529 = vld [vmem:[#allocation2 + $0x2a0] sm:$0xff]
          %v1530 = vld [vmem:[#allocation2 + $0x2a8] sm:$0xff]
          %v1531 = vld [vmem:[#allocation2 + $0x2b0] sm:$0xff]
          %v1532 = vld [vmem:[#allocation2 + $0x2b8] sm:$0xff]
          %v1533 = vld [vmem:[#allocation2 + $0x2c0] sm:$0xff]
          %v1534 = vld [vmem:[#allocation2 + $0x2c8] sm:$0xff]
          %v1535 = vld [vmem:[#allocation2 + $0x2d0] sm:$0xff]
          %v1536 = vld [vmem:[#allocation2 + $0x2d8] sm:$0xff]
          %v1537 = vld [vmem:[#allocation2 + $0x2e0] sm:$0xff]
          %v1538 = vld [vmem:[#allocation2 + $0x2e8] sm:$0xff]
          %v1539 = vld [vmem:[#allocation2 + $0x2f0] sm:$0xff]
          %v1540 = vld [vmem:[#allocation2 + $0x2f8] sm:$0xff]
          %v1541 = vld [vmem:[#allocation2 + $0x300] sm:$0xff]
          %v1542 = vld [vmem:[#allocation2 + $0x308] sm:$0xff]
          %v1543 = vld [vmem:[#allocation2 + $0x310] sm:$0xff]
          %v1544 = vld [vmem:[#allocation2 + $0x318] sm:$0xff]
          %v1545 = vld [vmem:[#allocation2 + $0x320] sm:$0xff]
          %v1546 = vld [vmem:[#allocation2 + $0x328] sm:$0xff]
          %v1547 = vld [vmem:[#allocation2 + $0x330] sm:$0xff]
          %v1548 = vld [vmem:[#allocation2 + $0x338] sm:$0xff]
          %v1549 = vld [vmem:[#allocation2 + $0x340] sm:$0xff]
          %v1550 = vld [vmem:[#allocation2 + $0x348] sm:$0xff]
          %v1551 = vld [vmem:[#allocation2 + $0x350] sm:$0xff]
          %v1552 = vld [vmem:[#allocation2 + $0x358] sm:$0xff]
          %v1553 = vld [vmem:[#allocation2 + $0x360] sm:$0xff]
          %v1554 = vld [vmem:[#allocation2 + $0x368] sm:$0xff]
          %v1555 = vld [vmem:[#allocation2 + $0x370] sm:$0xff]
          %v1556 = vld [vmem:[#allocation2 + $0x378] sm:$0xff]
          %v1557 = vld [vmem:[#allocation2 + $0x380] sm:$0xff]
          %v1558 = vld [vmem:[#allocation2 + $0x388] sm:$0xff]
          %v1559 = vld [vmem:[#allocation2 + $0x390] sm:$0xff]
          %v1560 = vld [vmem:[#allocation2 + $0x398] sm:$0xff]
          %v1561 = vld [vmem:[#allocation2 + $0x3a0] sm:$0xff]
          %v1562 = vld [vmem:[#allocation2 + $0x3a8] sm:$0xff]
          %v1563 = vld [vmem:[#allocation2 + $0x3b0] sm:$0xff]
          %v1564 = vld [vmem:[#allocation2 + $0x3b8] sm:$0xff]
          %v1565 = vld [vmem:[#allocation2 + $0x3c0] sm:$0xff]
          %v1566 = vld [vmem:[#allocation2 + $0x3c8] sm:$0xff]
          %v1567 = vld [vmem:[#allocation2 + $0x3d0] sm:$0xff]
          %v1568 = vld [vmem:[#allocation2 + $0x3d8] sm:$0xff]
          %v1569 = vld [vmem:[#allocation2 + $0x3e0] sm:$0xff]
          %v1570 = vld [vmem:[#allocation2 + $0x3e8] sm:$0xff]
          %v1571 = vld [vmem:[#allocation2 + $0x3f0] sm:$0xff]
          %v1572 = vld [vmem:[#allocation2 + $0x3f8] sm:$0xff]
          %v1573 = vld [vmem:[%s250] sm:$0x3]
          %v1575 = vlaneseq
          %v1576 = vshrl.u32 %v1575, 7
          %v1577 = vsub.s32 0, %v1576
          %v1578 = vrot.slane %v1573, %v1577
          %v1579 = vlaneseq
          %v1580 = vshrl.u32 %v1579, 7
          %v1581 = vsub.s32 1, %v1580
          %v1582 = vrot.slane %v1573, %v1581
          %v1585 = vadd.f32 %v1445, %v1578
          %v1586 = vadd.f32 %v1446, %v1582
          %v1587 = vadd.f32 %v1447, %v1578
          %v1588 = vadd.f32 %v1448, %v1582
          %v1589 = vadd.f32 %v1449, %v1578
          %v1590 = vadd.f32 %v1450, %v1582
          %v1591 = vadd.f32 %v1451, %v1578
          %v1592 = vadd.f32 %v1452, %v1582
          %v1593 = vadd.f32 %v1453, %v1578
          %v1594 = vadd.f32 %v1454, %v1582
          %v1595 = vadd.f32 %v1455, %v1578
          %v1596 = vadd.f32 %v1456, %v1582
          %v1597 = vadd.f32 %v1457, %v1578
          %v1598 = vadd.f32 %v1458, %v1582
          %v1599 = vadd.f32 %v1459, %v1578
          %v1600 = vadd.f32 %v1460, %v1582
          %v1601 = vadd.f32 %v1461, %v1578
          %v1602 = vadd.f32 %v1462, %v1582
          %v1603 = vadd.f32 %v1463, %v1578
          %v1604 = vadd.f32 %v1464, %v1582
          %v1605 = vadd.f32 %v1465, %v1578
          %v1606 = vadd.f32 %v1466, %v1582
          %v1607 = vadd.f32 %v1467, %v1578
          %v1608 = vadd.f32 %v1468, %v1582
          %v1609 = vadd.f32 %v1469, %v1578
          %v1610 = vadd.f32 %v1470, %v1582
          %v1611 = vadd.f32 %v1471, %v1578
          %v1612 = vadd.f32 %v1472, %v1582
          %v1613 = vadd.f32 %v1473, %v1578
          %v1614 = vadd.f32 %v1474, %v1582
          %v1615 = vadd.f32 %v1475, %v1578
          %v1616 = vadd.f32 %v1476, %v1582
          %v1617 = vadd.f32 %v1477, %v1578
          %v1618 = vadd.f32 %v1478, %v1582
          %v1619 = vadd.f32 %v1479, %v1578
          %v1620 = vadd.f32 %v1480, %v1582
          %v1621 = vadd.f32 %v1481, %v1578
          %v1622 = vadd.f32 %v1482, %v1582
          %v1623 = vadd.f32 %v1483, %v1578
          %v1624 = vadd.f32 %v1484, %v1582
          %v1625 = vadd.f32 %v1485, %v1578
          %v1626 = vadd.f32 %v1486, %v1582
          %v1627 = vadd.f32 %v1487, %v1578
          %v1628 = vadd.f32 %v1488, %v1582
          %v1629 = vadd.f32 %v1489, %v1578
          %v1630 = vadd.f32 %v1490, %v1582
          %v1631 = vadd.f32 %v1491, %v1578
          %v1632 = vadd.f32 %v1492, %v1582
          %v1633 = vadd.f32 %v1493, %v1578
          %v1634 = vadd.f32 %v1494, %v1582
          %v1635 = vadd.f32 %v1495, %v1578
          %v1636 = vadd.f32 %v1496, %v1582
          %v1637 = vadd.f32 %v1497, %v1578
          %v1638 = vadd.f32 %v1498, %v1582
          %v1639 = vadd.f32 %v1499, %v1578
          %v1640 = vadd.f32 %v1500, %v1582
          %v1641 = vadd.f32 %v1501, %v1578
          %v1642 = vadd.f32 %v1502, %v1582
          %v1643 = vadd.f32 %v1503, %v1578
          %v1644 = vadd.f32 %v1504, %v1582
          %v1645 = vadd.f32 %v1505, %v1578
          %v1646 = vadd.f32 %v1506, %v1582
          %v1647 = vadd.f32 %v1507, %v1578
          %v1648 = vadd.f32 %v1508, %v1582
          %v1649 = vadd.f32 %v1509, %v1578
          %v1650 = vadd.f32 %v1510, %v1582
          %v1651 = vadd.f32 %v1511, %v1578
          %v1652 = vadd.f32 %v1512, %v1582
          %v1653 = vadd.f32 %v1513, %v1578
          %v1654 = vadd.f32 %v1514, %v1582
          %v1655 = vadd.f32 %v1515, %v1578
          %v1656 = vadd.f32 %v1516, %v1582
          %v1657 = vadd.f32 %v1517, %v1578
          %v1658 = vadd.f32 %v1518, %v1582
          %v1659 = vadd.f32 %v1519, %v1578
          %v1660 = vadd.f32 %v1520, %v1582
          %v1661 = vadd.f32 %v1521, %v1578
          %v1662 = vadd.f32 %v1522, %v1582
          %v1663 = vadd.f32 %v1523, %v1578
          %v1664 = vadd.f32 %v1524, %v1582
          %v1665 = vadd.f32 %v1525, %v1578
          %v1666 = vadd.f32 %v1526, %v1582
          %v1667 = vadd.f32 %v1527, %v1578
          %v1668 = vadd.f32 %v1528, %v1582
          %v1669 = vadd.f32 %v1529, %v1578
          %v1670 = vadd.f32 %v1530, %v1582
          %v1671 = vadd.f32 %v1531, %v1578
          %v1672 = vadd.f32 %v1532, %v1582
          %v1673 = vadd.f32 %v1533, %v1578
          %v1674 = vadd.f32 %v1534, %v1582
          %v1675 = vadd.f32 %v1535, %v1578
          %v1676 = vadd.f32 %v1536, %v1582
          %v1677 = vadd.f32 %v1537, %v1578
          %v1678 = vadd.f32 %v1538, %v1582
          %v1679 = vadd.f32 %v1539, %v1578
          %v1680 = vadd.f32 %v1540, %v1582
          %v1681 = vadd.f32 %v1541, %v1578
          %v1682 = vadd.f32 %v1542, %v1582
          %v1683 = vadd.f32 %v1543, %v1578
          %v1684 = vadd.f32 %v1544, %v1582
          %v1685 = vadd.f32 %v1545, %v1578
          %v1686 = vadd.f32 %v1546, %v1582
          %v1687 = vadd.f32 %v1547, %v1578
          %v1688 = vadd.f32 %v1548, %v1582
          %v1689 = vadd.f32 %v1549, %v1578
          %v1690 = vadd.f32 %v1550, %v1582
          %v1691 = vadd.f32 %v1551, %v1578
          %v1692 = vadd.f32 %v1552, %v1582
          %v1693 = vadd.f32 %v1553, %v1578
          %v1694 = vadd.f32 %v1554, %v1582
          %v1695 = vadd.f32 %v1555, %v1578
          %v1696 = vadd.f32 %v1556, %v1582
          %v1697 = vadd.f32 %v1557, %v1578
          %v1698 = vadd.f32 %v1558, %v1582
          %v1699 = vadd.f32 %v1559, %v1578
          %v1700 = vadd.f32 %v1560, %v1582
          %v1701 = vadd.f32 %v1561, %v1578
          %v1702 = vadd.f32 %v1562, %v1582
          %v1703 = vadd.f32 %v1563, %v1578
          %v1704 = vadd.f32 %v1564, %v1582
          %v1705 = vadd.f32 %v1565, %v1578
          %v1706 = vadd.f32 %v1566, %v1582
          %v1707 = vadd.f32 %v1567, %v1578
          %v1708 = vadd.f32 %v1568, %v1582
          %v1709 = vadd.f32 %v1569, %v1578
          %v1710 = vadd.f32 %v1570, %v1582
          %v1711 = vadd.f32 %v1571, %v1578
          %v1712 = vadd.f32 %v1572, %v1582
          %1713 = vst [vmem:[%s277] sm:$0xff] %v1585
          %1714 = vst [vmem:[%s277 + $0x8] sm:$0xff] %v1586
          %1715 = vst [vmem:[%s277 + $0x10] sm:$0xff] %v1587
          %1716 = vst [vmem:[%s277 + $0x18] sm:$0xff] %v1588
          %1717 = vst [vmem:[%s277 + $0x20] sm:$0xff] %v1589
          %1718 = vst [vmem:[%s277 + $0x28] sm:$0xff] %v1590
          %1719 = vst [vmem:[%s277 + $0x30] sm:$0xff] %v1591
          %1720 = vst [vmem:[%s277 + $0x38] sm:$0xff] %v1592
          %1721 = vst [vmem:[%s277 + $0x40] sm:$0xff] %v1593
          %1722 = vst [vmem:[%s277 + $0x48] sm:$0xff] %v1594
          %1723 = vst [vmem:[%s277 + $0x50] sm:$0xff] %v1595
          %1724 = vst [vmem:[%s277 + $0x58] sm:$0xff] %v1596
          %1725 = vst [vmem:[%s277 + $0x60] sm:$0xff] %v1597
          %1726 = vst [vmem:[%s277 + $0x68] sm:$0xff] %v1598
          %1727 = vst [vmem:[%s277 + $0x70] sm:$0xff] %v1599
          %1728 = vst [vmem:[%s277 + $0x78] sm:$0xff] %v1600
          %1729 = vst [vmem:[%s277 + $0x80] sm:$0xff] %v1601
          %1730 = vst [vmem:[%s277 + $0x88] sm:$0xff] %v1602
          %1731 = vst [vmem:[%s277 + $0x90] sm:$0xff] %v1603
          %1732 = vst [vmem:[%s277 + $0x98] sm:$0xff] %v1604
          %1733 = vst [vmem:[%s277 + $0xa0] sm:$0xff] %v1605
          %1734 = vst [vmem:[%s277 + $0xa8] sm:$0xff] %v1606
          %1735 = vst [vmem:[%s277 + $0xb0] sm:$0xff] %v1607
          %1736 = vst [vmem:[%s277 + $0xb8] sm:$0xff] %v1608
          %1737 = vst [vmem:[%s277 + $0xc0] sm:$0xff] %v1609
          %1738 = vst [vmem:[%s277 + $0xc8] sm:$0xff] %v1610
          %1739 = vst [vmem:[%s277 + $0xd0] sm:$0xff] %v1611
          %1740 = vst [vmem:[%s277 + $0xd8] sm:$0xff] %v1612
          %1741 = vst [vmem:[%s277 + $0xe0] sm:$0xff] %v1613
          %1742 = vst [vmem:[%s277 + $0xe8] sm:$0xff] %v1614
          %1743 = vst [vmem:[%s277 + $0xf0] sm:$0xff] %v1615
          %1744 = vst [vmem:[%s277 + $0xf8] sm:$0xff] %v1616
          %1745 = vst [vmem:[%s277 + $0x100] sm:$0xff] %v1617
          %1746 = vst [vmem:[%s277 + $0x108] sm:$0xff] %v1618
          %1747 = vst [vmem:[%s277 + $0x110] sm:$0xff] %v1619
          %1748 = vst [vmem:[%s277 + $0x118] sm:$0xff] %v1620
          %1749 = vst [vmem:[%s277 + $0x120] sm:$0xff] %v1621
          %1750 = vst [vmem:[%s277 + $0x128] sm:$0xff] %v1622
          %1751 = vst [vmem:[%s277 + $0x130] sm:$0xff] %v1623
          %1752 = vst [vmem:[%s277 + $0x138] sm:$0xff] %v1624
          %1753 = vst [vmem:[%s277 + $0x140] sm:$0xff] %v1625
          %1754 = vst [vmem:[%s277 + $0x148] sm:$0xff] %v1626
          %1755 = vst [vmem:[%s277 + $0x150] sm:$0xff] %v1627
          %1756 = vst [vmem:[%s277 + $0x158] sm:$0xff] %v1628
          %1757 = vst [vmem:[%s277 + $0x160] sm:$0xff] %v1629
          %1758 = vst [vmem:[%s277 + $0x168] sm:$0xff] %v1630
          %1759 = vst [vmem:[%s277 + $0x170] sm:$0xff] %v1631
          %1760 = vst [vmem:[%s277 + $0x178] sm:$0xff] %v1632
          %1761 = vst [vmem:[%s277 + $0x180] sm:$0xff] %v1633
          %1762 = vst [vmem:[%s277 + $0x188] sm:$0xff] %v1634
          %1763 = vst [vmem:[%s277 + $0x190] sm:$0xff] %v1635
          %1764 = vst [vmem:[%s277 + $0x198] sm:$0xff] %v1636
          %1765 = vst [vmem:[%s277 + $0x1a0] sm:$0xff] %v1637
          %1766 = vst [vmem:[%s277 + $0x1a8] sm:$0xff] %v1638
          %1767 = vst [vmem:[%s277 + $0x1b0] sm:$0xff] %v1639
          %1768 = vst [vmem:[%s277 + $0x1b8] sm:$0xff] %v1640
          %1769 = vst [vmem:[%s277 + $0x1c0] sm:$0xff] %v1641
          %1770 = vst [vmem:[%s277 + $0x1c8] sm:$0xff] %v1642
          %1771 = vst [vmem:[%s277 + $0x1d0] sm:$0xff] %v1643
          %1772 = vst [vmem:[%s277 + $0x1d8] sm:$0xff] %v1644
          %1773 = vst [vmem:[%s277 + $0x1e0] sm:$0xff] %v1645
          %1774 = vst [vmem:[%s277 + $0x1e8] sm:$0xff] %v1646
          %1775 = vst [vmem:[%s277 + $0x1f0] sm:$0xff] %v1647
          %1776 = vst [vmem:[%s277 + $0x1f8] sm:$0xff] %v1648
          %1777 = vst [vmem:[%s277 + $0x200] sm:$0xff] %v1649
          %1778 = vst [vmem:[%s277 + $0x208] sm:$0xff] %v1650
          %1779 = vst [vmem:[%s277 + $0x210] sm:$0xff] %v1651
          %1780 = vst [vmem:[%s277 + $0x218] sm:$0xff] %v1652
          %1781 = vst [vmem:[%s277 + $0x220] sm:$0xff] %v1653
          %1782 = vst [vmem:[%s277 + $0x228] sm:$0xff] %v1654
          %1783 = vst [vmem:[%s277 + $0x230] sm:$0xff] %v1655
          %1784 = vst [vmem:[%s277 + $0x238] sm:$0xff] %v1656
          %1785 = vst [vmem:[%s277 + $0x240] sm:$0xff] %v1657
          %1786 = vst [vmem:[%s277 + $0x248] sm:$0xff] %v1658
          %1787 = vst [vmem:[%s277 + $0x250] sm:$0xff] %v1659
          %1788 = vst [vmem:[%s277 + $0x258] sm:$0xff] %v1660
          %1789 = vst [vmem:[%s277 + $0x260] sm:$0xff] %v1661
          %1790 = vst [vmem:[%s277 + $0x268] sm:$0xff] %v1662
          %1791 = vst [vmem:[%s277 + $0x270] sm:$0xff] %v1663
          %1792 = vst [vmem:[%s277 + $0x278] sm:$0xff] %v1664
          %1793 = vst [vmem:[%s277 + $0x280] sm:$0xff] %v1665
          %1794 = vst [vmem:[%s277 + $0x288] sm:$0xff] %v1666
          %1795 = vst [vmem:[%s277 + $0x290] sm:$0xff] %v1667
          %1796 = vst [vmem:[%s277 + $0x298] sm:$0xff] %v1668
          %1797 = vst [vmem:[%s277 + $0x2a0] sm:$0xff] %v1669
          %1798 = vst [vmem:[%s277 + $0x2a8] sm:$0xff] %v1670
          %1799 = vst [vmem:[%s277 + $0x2b0] sm:$0xff] %v1671
          %1800 = vst [vmem:[%s277 + $0x2b8] sm:$0xff] %v1672
          %1801 = vst [vmem:[%s277 + $0x2c0] sm:$0xff] %v1673
          %1802 = vst [vmem:[%s277 + $0x2c8] sm:$0xff] %v1674
          %1803 = vst [vmem:[%s277 + $0x2d0] sm:$0xff] %v1675
          %1804 = vst [vmem:[%s277 + $0x2d8] sm:$0xff] %v1676
          %1805 = vst [vmem:[%s277 + $0x2e0] sm:$0xff] %v1677
          %1806 = vst [vmem:[%s277 + $0x2e8] sm:$0xff] %v1678
          %1807 = vst [vmem:[%s277 + $0x2f0] sm:$0xff] %v1679
          %1808 = vst [vmem:[%s277 + $0x2f8] sm:$0xff] %v1680
          %1809 = vst [vmem:[%s277 + $0x300] sm:$0xff] %v1681
          %1810 = vst [vmem:[%s277 + $0x308] sm:$0xff] %v1682
          %1811 = vst [vmem:[%s277 + $0x310] sm:$0xff] %v1683
          %1812 = vst [vmem:[%s277 + $0x318] sm:$0xff] %v1684
          %1813 = vst [vmem:[%s277 + $0x320] sm:$0xff] %v1685
          %1814 = vst [vmem:[%s277 + $0x328] sm:$0xff] %v1686
          %1815 = vst [vmem:[%s277 + $0x330] sm:$0xff] %v1687
          %1816 = vst [vmem:[%s277 + $0x338] sm:$0xff] %v1688
          %1817 = vst [vmem:[%s277 + $0x340] sm:$0xff] %v1689
          %1818 = vst [vmem:[%s277 + $0x348] sm:$0xff] %v1690
          %1819 = vst [vmem:[%s277 + $0x350] sm:$0xff] %v1691
          %1820 = vst [vmem:[%s277 + $0x358] sm:$0xff] %v1692
          %1821 = vst [vmem:[%s277 + $0x360] sm:$0xff] %v1693
          %1822 = vst [vmem:[%s277 + $0x368] sm:$0xff] %v1694
          %1823 = vst [vmem:[%s277 + $0x370] sm:$0xff] %v1695
          %1824 = vst [vmem:[%s277 + $0x378] sm:$0xff] %v1696
          %1825 = vst [vmem:[%s277 + $0x380] sm:$0xff] %v1697
          %1826 = vst [vmem:[%s277 + $0x388] sm:$0xff] %v1698
          %1827 = vst [vmem:[%s277 + $0x390] sm:$0xff] %v1699
          %1828 = vst [vmem:[%s277 + $0x398] sm:$0xff] %v1700
          %1829 = vst [vmem:[%s277 + $0x3a0] sm:$0xff] %v1701
          %1830 = vst [vmem:[%s277 + $0x3a8] sm:$0xff] %v1702
          %1831 = vst [vmem:[%s277 + $0x3b0] sm:$0xff] %v1703
          %1832 = vst [vmem:[%s277 + $0x3b8] sm:$0xff] %v1704
          %1833 = vst [vmem:[%s277 + $0x3c0] sm:$0xff] %v1705
          %1834 = vst [vmem:[%s277 + $0x3c8] sm:$0xff] %v1706
          %1835 = vst [vmem:[%s277 + $0x3d0] sm:$0xff] %v1707
          %1836 = vst [vmem:[%s277 + $0x3d8] sm:$0xff] %v1708
          %1837 = vst [vmem:[%s277 + $0x3e0] sm:$0xff] %v1709
          %1838 = vst [vmem:[%s277 + $0x3e8] sm:$0xff] %v1710
          %1839 = vst [vmem:[%s277 + $0x3f0] sm:$0xff] %v1711
          %1840 = vst [vmem:[%s277 + $0x3f8] sm:$0xff] %v1712
        $region52: #{tpu_custom_call.1} parent=31 // pred_fallthru
          _
        %s1841 = sand.u32 %s132, 1
        %s1842 = scalar_lea.sflag [#allocation5], %s1841
        %s1843 = sand.u32 %s132, 1
        %s1844 = smul.addr %s1843, 1024
        %s1845 = scalar_lea.vmem [#allocation9], %s1844
        // Predicated region
        $region53: #{tpu_custom_call.1} parent=31 // pred_check
          %p1846 = pneg %p142
        $region54: #{tpu_custom_call.1} parent=31 // pred_check_branch
          %1848 = sbr.rel (%p1846) target = $region56
        $region55: #{tpu_custom_call.1} parent=31 // pred_region
          %s1849 = smul.u32 64, %s26
          %s1850 = smul.u32 2, %s27
          %s1852 = ssub.s32 16384, 16384
          %1853 = vsyncadd %s1842, %s1852
          %s1854 = smul.addr %s1849, 6
          %s1855 = sadd.s32 %s1850, %s1854
          %s1856 = smul.addr %s1855, 128
          %s1857 = scalar_lea.hbm %s3, %s1856
          %s1858 = sshll.u32 %s1845, 4
          %s1859 = int_to_ptr.vmem [resolvable:$true] %s1858
          %1864 = dma.vmem_to_hbm [thread:$0]  %s1859, 16384, %s1857, %s1842, 256, 768, 16
        $region56: #{tpu_custom_call.1} parent=31 // pred_fallthru
          _
      $region32: #{tpu_custom_call.1} parent=5 // pred_fallthru
        _
      %p1865 = scmp.le.s32.totalorder 2, %s16
      // Predicated region
      $region57: #{tpu_custom_call.1} parent=5 // pred_check
        %p1866 = pneg %p1865
      $region58: #{tpu_custom_call.1} parent=5 // pred_check_branch
        %1868 = sbr.rel (%p1866) target = $region60
      $region59: #{tpu_custom_call.1} parent=5 // pred_region
        %s1869 = ssub.s32 %s16, 2
        // Predicated region
        $region61: #{tpu_custom_call.1} parent=59 // pred_check
          %p1870 = pneg %p148
        $region62: #{tpu_custom_call.1} parent=59 // pred_check_branch
          %1872 = sbr.rel (%p1870) target = $region64
        $region63: #{tpu_custom_call.1} parent=59 // pred_region
          %s1873 = sand.u32 %s133, 1
          %s1874 = scalar_lea.sflag [#allocation5], %s1873
          %s1875 = sand.u32 %s133, 1
          %s1876 = smul.addr %s1875, 1024
          %s1877 = scalar_lea.vmem [#allocation9], %s1876
          %1878 = dma.done %s1874, 16384
        $region64: #{tpu_custom_call.1} parent=59 // pred_fallthru
          _
      $region60: #{tpu_custom_call.1} parent=5 // pred_fallthru
        _
    $region6: #{tpu_custom_call.1} parent=1 // loop_footer
      %s20 = sadd.s32 1, %s16
    $region7: #{tpu_custom_call.1} parent=1 // loop_footer_branch
      %15 = sbr.rel target = $region3
    $region8: #{tpu_custom_call.1} parent=1 // loop_exit
      _
    %1879 = vsyncpa [#allocation4], 1
    %s1880 = scalar_lea.sflag [#allocation4], 1
    %1881 = vsyncpa %s1880, 1
    %1882 = vsyncpa [#allocation7], 1
    %s1883 = scalar_lea.sflag [#allocation7], 1
    %1884 = vsyncpa %s1883, 1
    %1885 = vsyncpa [#allocation5], 1
    %s1886 = scalar_lea.sflag [#allocation5], 1
    %1887 = vsyncpa %s1886, 1

</llo_original>
